<compile_context>
chip_gen: v7x
topology: tpu7x:2x2x1
jax: 0.10.0
libtpu: 0.0.40
codegen_flags: <defaults>
</compile_context>

<pallas_src>
import functools

import jax
import jax.numpy as jnp
from jax.experimental import pallas as pl
from jax.experimental.pallas import tpu as pltpu


# ------------------------------------------------------------------- kernel ---

def _pagfm_kernel(x_ref, y_ref, a_ref, b_ref, g_ref, u_ref, v_ref, s0_ref, o_ref,
                  *, c_in, hy):
    """Fused PagFM forward for one (batch, H-block) tile.

    x_ref : (C, TH, Wp)    VMEM  high-res input block
    y_ref : (C*HY, WY)     VMEM  full low-res input for this batch (channel-flattened)
    a_ref : (TH, HY)       VMEM  H-direction bilinear interp rows for this block
    b_ref : (WY, Wp)       VMEM  W-direction bilinear interp matrix (lane-padded)
    g_ref : (C, C)         SMEM  Gram matrix  Wfx @ Wfy^T   (conv+BN folded)
    u_ref : (C,)           SMEM  Wfx @ bfy
    v_ref : (C,)           SMEM  Wfy @ bfx
    s0_ref: (1,)           SMEM  bfx . bfy
    o_ref : (C, TH, Wp)    VMEM  output block (also used as y_up staging scratch)
    """
    a = a_ref[...]                       # (TH, HY)
    b = b_ref[...]                       # (WY, Wp)

    # ---- Bilinear upsample of all C y channels (exact, matmul form). -------
    # W direction batched over channels: one (C*HY, WY) @ (WY, Wp) matmul.
    inner_all = jnp.dot(y_ref[...], b, preferred_element_type=jnp.float32)   # (C*HY, Wp)
    # H direction per channel (M = TH rows); write the upsampled channel
    # straight into the output block, which doubles as scratch.
    for c in range(c_in):
        o_ref[c] = jnp.dot(a, inner_all[c * hy:(c + 1) * hy, :],
                           preferred_element_type=jnp.float32)               # (TH, Wp)

    # ---- Similarity map: Gram-factored bilinear form on the VPU. -----------
    # sim_acc = sum_{c,c'} G[c,c'] x_c y_up_c' + sum_c u_c x_c + sum_c v_c y_up_c + s0
    acc = s0_ref[0] + v_ref[0] * o_ref[0]
    for c in range(1, c_in):
        acc = acc + v_ref[c] * o_ref[c]
    for c in range(c_in):
        gplane = g_ref[c, 0] * o_ref[0]
        for cp in range(1, c_in):
            gplane = gplane + g_ref[c, cp] * o_ref[cp]
        acc = acc + x_ref[c] * (gplane + u_ref[c])
    sim = jax.nn.sigmoid(acc)            # EUP (free slot)

    # ---- Blend: (1 - sim) * x + sim * y_up  ==  x + sim * (y_up - x). ------
    for c in range(c_in):
        xc = x_ref[c]
        o_ref[c] = xc + sim * (o_ref[c] - xc)


# ----------------------------------------------------------------- wrapper ----

def _interp_matrix(out_size, in_size):
    """1-D bilinear (align_corners=False, edge-clamped) interpolation operator.

    Returns M of shape (out_size, in_size) with at most two nonzeros per row,
    so that  up_1d = M @ x_1d  matches PyTorch F.interpolate semantics exactly.
    Rows sum to 1, so up(const) == const (used to move f_y after the upsample).
    """
    scale = in_size / out_size
    src = (jnp.arange(out_size, dtype=jnp.float32) + 0.5) * scale - 0.5
    src = jnp.maximum(src, 0.0)
    i0 = jnp.minimum(jnp.floor(src).astype(jnp.int32), in_size - 1)
    i1 = jnp.minimum(i0 + 1, in_size - 1)
    frac = src - i0.astype(jnp.float32)
    rows = jnp.arange(out_size)
    m = jnp.zeros((out_size, in_size), jnp.float32)
    m = m.at[rows, i0].add(1.0 - frac)
    m = m.at[rows, i1].add(frac)
    return m


def fold_conv_bn(w_conv, gamma, beta, mean, var, eps=1e-5):
    """Fold eval-mode BatchNorm into a 1x1 conv.  w_conv: (Cin, Cout)."""
    scale = gamma / jnp.sqrt(var + eps)
    w = (w_conv * scale[None, :]).astype(jnp.float32)
    b = (beta - mean * scale).astype(jnp.float32)           # (Cout,)
    return w, b


def _gram_params(wfx, bfx, wfy, bfy):
    """Host-side folding of the two 1x1 conv+BN branches into a bilinear form."""
    g = jnp.dot(wfx, wfy.T)                                  # (C, C)
    u = jnp.dot(wfx, bfy)                                    # (C,)
    v = jnp.dot(wfy, bfx)                                    # (C,)
    s0 = jnp.reshape(jnp.dot(bfx, bfy), (1,))                # (1,)
    return g, u, v, s0


def pagfm_forward(x_nchw, y_nchw, wfx, bfx, wfy, bfy, *, th=None):
    """PagFM forward (after_relu=False, with_channel=False).  NCHW in / NCHW out."""
    n, c, h, w = x_nchw.shape
    _, _, hy, wy = y_nchw.shape

    # Lane-dense last dim: pad W up to a multiple of 128 (masked partial stores
    # on a ragged W were flagged as the biggest single perf lever).
    wp = ((w + 127) // 128) * 128
    x_in = x_nchw if wp == w else jnp.pad(
        x_nchw, ((0, 0), (0, 0), (0, 0), (0, wp - w)))

    a_mat = _interp_matrix(h, hy)                            # (H, HY)
    b_mat = _interp_matrix(w, wy).T                          # (WY, W)
    if wp != w:
        b_mat = jnp.pad(b_mat, ((0, 0), (0, wp - w)))        # (WY, Wp)

    g_mat, u_vec, v_vec, s0 = _gram_params(wfx, bfx, wfy, bfy)

    # Pre-flatten y so the W-direction upsample is one batched 2-D matmul.
    y_flat = y_nchw.reshape(n, c * hy, wy)

    # --- VMEM budget: double-buffered blocks + in-kernel intermediates. -----
    try:
        info = pltpu.get_tpu_info()
        phys_vmem = int(getattr(info, "vmem_capacity_bytes", 0)) or 64 * 1024 * 1024
    except Exception:
        phys_vmem = 64 * 1024 * 1024          # conservative: v7x per-core VMEM

    def vmem_estimate(tile_h):
        blocks = 2 * (2 * c * tile_h * wp     # x block + out block (double-buffered)
                      + c * hy * wy           # flattened y block
                      + tile_h * hy           # A rows
                      + wy * wp)              # B
        interm = c * hy * wp + 4 * tile_h * wp  # inner_all + acc/sim/live planes
        return 4 * (blocks + interm)

    if th is None:
        budget = int(0.6 * phys_vmem)
        cands = [h] + [t for t in (512, 256, 128, 64, 32) if t < h and h % t == 0]
        th = cands[-1]
        for t in cands:
            if vmem_estimate(t) <= budget:
                th = t
                break
    n_hb = pl.cdiv(h, th)

    vmem_limit = int(min(0.75 * phys_vmem,
                         max(16 * 1024 * 1024, 2 * vmem_estimate(th))))

    kernel = functools.partial(_pagfm_kernel, c_in=c, hy=hy)

    flops = int(n * (2 * c * hy * wy * wp          # W-direction upsample matmul
                     + 2 * c * h * hy * wp         # H-direction upsample matmuls
                     + 2 * (c * c + 3 * c + 2) * h * wp))   # VPU bilinear form + blend
    cost = pl.CostEstimate(
        flops=flops,
        transcendentals=int(n * h * wp),
        bytes_accessed=int(4 * (x_in.size + y_flat.size + n * c * h * wp)))

    out_full = pl.pallas_call(
        kernel,
        out_shape=jax.ShapeDtypeStruct((n, c, h, wp), jnp.float32),
        grid=(n, n_hb),
        in_specs=[
            pl.BlockSpec((None, c, th, wp), lambda i, j: (i, 0, j, 0)),   # x block
            pl.BlockSpec((None, c * hy, wy), lambda i, j: (i, 0, 0)),     # low-res y
            pl.BlockSpec((th, hy), lambda i, j: (j, 0)),                  # A rows
            pl.BlockSpec((wy, wp), lambda i, j: (0, 0)),                  # B
            pl.BlockSpec(memory_space=pltpu.MemorySpace.SMEM),            # G
            pl.BlockSpec(memory_space=pltpu.MemorySpace.SMEM),            # u
            pl.BlockSpec(memory_space=pltpu.MemorySpace.SMEM),            # v
            pl.BlockSpec(memory_space=pltpu.MemorySpace.SMEM),            # s0
        ],
        out_specs=pl.BlockSpec((None, c, th, wp), lambda i, j: (i, 0, j, 0)),
        compiler_params=pltpu.CompilerParams(
            dimension_semantics=("parallel", "parallel"),
            vmem_limit_bytes=vmem_limit,
        ),
        cost_estimate=cost,
    )(x_in, y_flat, a_mat, b_mat, g_mat, u_vec, v_vec, s0)

    return out_full if wp == w else out_full[..., :w]


# --------------------------------------------------------------- pure-JAX ref -

def _bilinear_resize_nchw(img, out_h, out_w):
    # Independent gather-based bilinear (PyTorch align_corners=False semantics).
    _, _, h_in, w_in = img.shape

    def idx(out_size, in_size):
        scale = in_size / out_size
        src = (jnp.arange(out_size, dtype=jnp.float32) + 0.5) * scale - 0.5
        src = jnp.maximum(src, 0.0)
        i0 = jnp.minimum(jnp.floor(src).astype(jnp.int32), in_size - 1)
        i1 = jnp.minimum(i0 + 1, in_size - 1)
        return i0, i1, src - i0.astype(jnp.float32)

    h0, h1, fh = idx(out_h, h_in)
    w0, w1, fw = idx(out_w, w_in)
    top = img[:, :, h0, :]
    bot = img[:, :, h1, :]
    rows = top * (1.0 - fh)[None, None, :, None] + bot * fh[None, None, :, None]
    left = rows[:, :, :, w0]
    right = rows[:, :, :, w1]
    return left * (1.0 - fw) + right * fw


def pagfm_reference(x, y, wfx, bfx, wfy, bfy):
    _, _, h, w = x.shape
    y_q = jnp.einsum("nchw,cm->nmhw", y, wfy) + bfy.reshape(1, -1, 1, 1)
    y_q = _bilinear_resize_nchw(y_q, h, w)
    x_k = jnp.einsum("nchw,cm->nmhw", x, wfx) + bfx.reshape(1, -1, 1, 1)
    sim = jax.nn.sigmoid(jnp.sum(x_k * y_q, axis=1, keepdims=True))
    y_up = _bilinear_resize_nchw(y, h, w)
    return (1.0 - sim) * x + sim * y_up


# --------------------------------------------------------------------- main ---

if __name__ == "__main__":
    key = jax.random.PRNGKey(0)
    ks = jax.random.split(key, 12)

    N, C, H, W = 2, 4, 16, 16          # x: high-res feature
    Hy, Wy = 8, 8                      # y: low-res feature
    MID = 8                            # mid_channels

    x = jax.random.normal(ks[0], (N, C, H, W), jnp.float32)
    y = jax.random.normal(ks[1], (N, C, Hy, Wy), jnp.float32)

    # f_x: Conv2d(C, MID, 1, bias=False) + BatchNorm2d(MID)  (eval-mode BN folded)
    wfx_conv = 0.3 * jax.random.normal(ks[2], (C, MID), jnp.float32)
    gx = 1.0 + 0.1 * jax.random.normal(ks[3], (MID,), jnp.float32)
    bx = 0.1 * jax.random.normal(ks[4], (MID,), jnp.float32)
    mx = 0.1 * jax.random.normal(ks[5], (MID,), jnp.float32)
    vx = jnp.abs(1.0 + 0.1 * jax.random.normal(ks[6], (MID,), jnp.float32))

    # f_y: Conv2d(C, MID, 1, bias=False) + BatchNorm2d(MID)
    wfy_conv = 0.3 * jax.random.normal(ks[7], (C, MID), jnp.float32)
    gy = 1.0 + 0.1 * jax.random.normal(ks[8], (MID,), jnp.float32)
    by = 0.1 * jax.random.normal(ks[9], (MID,), jnp.float32)
    my = 0.1 * jax.random.normal(ks[10], (MID,), jnp.float32)
    vy = jnp.abs(1.0 + 0.1 * jax.random.normal(ks[11], (MID,), jnp.float32))

    wfx, bfx = fold_conv_bn(wfx_conv, gx, bx, mx, vx)
    wfy, bfy = fold_conv_bn(wfy_conv, gy, by, my, vy)

    out = pagfm_forward(x, y, wfx, bfx, wfy, bfy)
    out = jax.block_until_ready(out)

    ref = pagfm_reference(x, y, wfx, bfx, wfy, bfy)
    assert out.shape == (N, C, H, W)
    err = float(jnp.max(jnp.abs(out - ref)))
    assert err < 1e-4, f"mismatch vs pure-JAX reference: {err}"

    print("KERNEL_OK")
</pallas_src>

<mosaic_0001>
module attributes {stable_mosaic.version = 11 : i64} {
  func.func @_pagfm_kernel(%arg0: i32, %arg1: i32, %arg2: memref<1x4x16x128xf32, #tpu.memory_space<vmem>>, %arg3: memref<1x32x8xf32, #tpu.memory_space<vmem>>, %arg4: memref<16x8xf32, #tpu.memory_space<vmem>>, %arg5: memref<8x128xf32, #tpu.memory_space<vmem>>, %arg6: memref<4x4xf32, #tpu.memory_space<smem>>, %arg7: memref<4xf32, #tpu.memory_space<smem>>, %arg8: memref<4xf32, #tpu.memory_space<smem>>, %arg9: memref<1xf32, #tpu.memory_space<smem>>, %arg10: memref<1x4x16x128xf32, #tpu.memory_space<vmem>>) attributes {dimension_semantics = [#tpu.dimension_semantics<parallel>, #tpu.dimension_semantics<parallel>], iteration_bounds = array<i64: 2, 1>, scalar_prefetch = 0 : i64, scratch_operands = 0 : i64, tpu.core_type = #tpu.core_type<tc>, window_params = [{transform_indices = @transform_0, window_bounds = array<i64: 1, 4, 16, 128>}, {transform_indices = @transform_1, window_bounds = array<i64: 1, 32, 8>}, {transform_indices = @transform_2, window_bounds = array<i64: 16, 8>}, {pipeline_mode = #tpu.pipeline_mode<synchronous>, transform_indices = @transform_3, window_bounds = array<i64: 8, 128>}, {transform_indices = @transform_4, window_bounds = array<i64: 4, 4>}, {transform_indices = @transform_5, window_bounds = array<i64: 4>}, {transform_indices = @transform_6, window_bounds = array<i64: 4>}, {transform_indices = @transform_7, window_bounds = array<i64: 1>}, {transform_indices = @transform_8, window_bounds = array<i64: 1, 4, 16, 128>}]} {
    %c0 = arith.constant 0 : index
    %c0_0 = arith.constant 0 : index
    %0 = vector.load %arg4[%c0, %c0_0] : memref<16x8xf32, #tpu.memory_space<vmem>>, vector<16x8xf32>
    %c0_1 = arith.constant 0 : index
    %c0_2 = arith.constant 0 : index
    %1 = vector.load %arg5[%c0_1, %c0_2] : memref<8x128xf32, #tpu.memory_space<vmem>>, vector<8x128xf32>
    %c0_3 = arith.constant 0 : index
    %c0_4 = arith.constant 0 : index
    %c0_5 = arith.constant 0 : index
    %2 = vector.load %arg3[%c0_3, %c0_4, %c0_5] : memref<1x32x8xf32, #tpu.memory_space<vmem>>, vector<1x32x8xf32>
    %3 = vector.shape_cast %2 : vector<1x32x8xf32> to vector<32x8xf32>
    %cst = arith.constant dense<0.000000e+00> : vector<32x128xf32>
    %4 = tpu.matmul %3, %1, %cst {dimension_numbers = #tpu.dot_dimension_numbers<[1], [0], [0], [1], [0, 0, 1, 1], [], []>} : vector<32x8xf32>, vector<8x128xf32>, vector<32x128xf32> -> vector<32x128xf32>
    %5 = vector.extract_strided_slice %4 {offsets = [0, 0], sizes = [8, 128], strides = [1, 1]} : vector<32x128xf32> to vector<8x128xf32>
    %cst_6 = arith.constant dense<0.000000e+00> : vector<16x128xf32>
    %6 = tpu.matmul %0, %5, %cst_6 {dimension_numbers = #tpu.dot_dimension_numbers<[1], [0], [0], [1], [0, 0, 1, 1], [], []>} : vector<16x8xf32>, vector<8x128xf32>, vector<16x128xf32> -> vector<16x128xf32>
    %c0_7 = arith.constant 0 : index
    %c0_8 = arith.constant 0 : index
    %c0_9 = arith.constant 0 : index
    %c0_10 = arith.constant 0 : index
    %7 = vector.load %arg10[%c0_7, %c0_8, %c0_9, %c0_10] : memref<1x4x16x128xf32, #tpu.memory_space<vmem>>, vector<1x1x16x128xf32>
    %8 = vector.shape_cast %7 : vector<1x1x16x128xf32> to vector<16x128xf32>
    %9 = vector.shape_cast %6 : vector<16x128xf32> to vector<1x1x16x128xf32>
    tpu.vector_store %arg10[%c0_7, %c0_8, %c0_9, %c0_10], %9 {strides = array<i32>} : memref<1x4x16x128xf32, #tpu.memory_space<vmem>>, vector<1x1x16x128xf32>,
    %10 = vector.extract_strided_slice %4 {offsets = [8, 0], sizes = [8, 128], strides = [1, 1]} : vector<32x128xf32> to vector<8x128xf32>
    %cst_11 = arith.constant dense<0.000000e+00> : vector<16x128xf32>
    %11 = tpu.matmul %0, %10, %cst_11 {dimension_numbers = #tpu.dot_dimension_numbers<[1], [0], [0], [1], [0, 0, 1, 1], [], []>} : vector<16x8xf32>, vector<8x128xf32>, vector<16x128xf32> -> vector<16x128xf32>
    %c0_12 = arith.constant 0 : index
    %c1 = arith.constant 1 : index
    %c0_13 = arith.constant 0 : index
    %c0_14 = arith.constant 0 : index
    %12 = vector.load %arg10[%c0_12, %c1, %c0_13, %c0_14] : memref<1x4x16x128xf32, #tpu.memory_space<vmem>>, vector<1x1x16x128xf32>
    %13 = vector.shape_cast %12 : vector<1x1x16x128xf32> to vector<16x128xf32>
    %14 = vector.shape_cast %11 : vector<16x128xf32> to vector<1x1x16x128xf32>
    tpu.vector_store %arg10[%c0_12, %c1, %c0_13, %c0_14], %14 {strides = array<i32>} : memref<1x4x16x128xf32, #tpu.memory_space<vmem>>, vector<1x1x16x128xf32>,
    %15 = vector.extract_strided_slice %4 {offsets = [16, 0], sizes = [8, 128], strides = [1, 1]} : vector<32x128xf32> to vector<8x128xf32>
    %cst_15 = arith.constant dense<0.000000e+00> : vector<16x128xf32>
    %16 = tpu.matmul %0, %15, %cst_15 {dimension_numbers = #tpu.dot_dimension_numbers<[1], [0], [0], [1], [0, 0, 1, 1], [], []>} : vector<16x8xf32>, vector<8x128xf32>, vector<16x128xf32> -> vector<16x128xf32>
    %c0_16 = arith.constant 0 : index
    %c2 = arith.constant 2 : index
    %c0_17 = arith.constant 0 : index
    %c0_18 = arith.constant 0 : index
    %17 = vector.load %arg10[%c0_16, %c2, %c0_17, %c0_18] : memref<1x4x16x128xf32, #tpu.memory_space<vmem>>, vector<1x1x16x128xf32>
    %18 = vector.shape_cast %17 : vector<1x1x16x128xf32> to vector<16x128xf32>
    %19 = vector.shape_cast %16 : vector<16x128xf32> to vector<1x1x16x128xf32>
    tpu.vector_store %arg10[%c0_16, %c2, %c0_17, %c0_18], %19 {strides = array<i32>} : memref<1x4x16x128xf32, #tpu.memory_space<vmem>>, vector<1x1x16x128xf32>,
    %20 = vector.extract_strided_slice %4 {offsets = [24, 0], sizes = [8, 128], strides = [1, 1]} : vector<32x128xf32> to vector<8x128xf32>
    %cst_19 = arith.constant dense<0.000000e+00> : vector<16x128xf32>
    %21 = tpu.matmul %0, %20, %cst_19 {dimension_numbers = #tpu.dot_dimension_numbers<[1], [0], [0], [1], [0, 0, 1, 1], [], []>} : vector<16x8xf32>, vector<8x128xf32>, vector<16x128xf32> -> vector<16x128xf32>
    %c0_20 = arith.constant 0 : index
    %c3 = arith.constant 3 : index
    %c0_21 = arith.constant 0 : index
    %c0_22 = arith.constant 0 : index
    %22 = vector.load %arg10[%c0_20, %c3, %c0_21, %c0_22] : memref<1x4x16x128xf32, #tpu.memory_space<vmem>>, vector<1x1x16x128xf32>
    %23 = vector.shape_cast %22 : vector<1x1x16x128xf32> to vector<16x128xf32>
    %24 = vector.shape_cast %21 : vector<16x128xf32> to vector<1x1x16x128xf32>
    tpu.vector_store %arg10[%c0_20, %c3, %c0_21, %c0_22], %24 {strides = array<i32>} : memref<1x4x16x128xf32, #tpu.memory_space<vmem>>, vector<1x1x16x128xf32>,
    %c0_23 = arith.constant 0 : index
    %25 = memref.load %arg9[%c0_23] : memref<1xf32, #tpu.memory_space<smem>>
    %c0_24 = arith.constant 0 : index
    %26 = memref.load %arg8[%c0_24] : memref<4xf32, #tpu.memory_space<smem>>
    %c0_25 = arith.constant 0 : index
    %c0_26 = arith.constant 0 : index
    %c0_27 = arith.constant 0 : index
    %c0_28 = arith.constant 0 : index
    %27 = vector.load %arg10[%c0_25, %c0_26, %c0_27, %c0_28] : memref<1x4x16x128xf32, #tpu.memory_space<vmem>>, vector<1x1x16x128xf32>
    %28 = vector.shape_cast %27 : vector<1x1x16x128xf32> to vector<16x128xf32>
    %29 = vector.broadcast %26 : f32 to vector<16x128xf32>
    %30 = arith.mulf %29, %28 : vector<16x128xf32>
    %31 = vector.broadcast %25 : f32 to vector<16x128xf32>
    %32 = arith.addf %31, %30 : vector<16x128xf32>
    %c1_29 = arith.constant 1 : index
    %33 = memref.load %arg8[%c1_29] : memref<4xf32, #tpu.memory_space<smem>>
    %c0_30 = arith.constant 0 : index
    %c1_31 = arith.constant 1 : index
    %c0_32 = arith.constant 0 : index
    %c0_33 = arith.constant 0 : index
    %34 = vector.load %arg10[%c0_30, %c1_31, %c0_32, %c0_33] : memref<1x4x16x128xf32, #tpu.memory_space<vmem>>, vector<1x1x16x128xf32>
    %35 = vector.shape_cast %34 : vector<1x1x16x128xf32> to vector<16x128xf32>
    %36 = vector.broadcast %33 : f32 to vector<16x128xf32>
    %37 = arith.mulf %36, %35 : vector<16x128xf32>
    %38 = arith.addf %32, %37 : vector<16x128xf32>
    %c2_34 = arith.constant 2 : index
    %39 = memref.load %arg8[%c2_34] : memref<4xf32, #tpu.memory_space<smem>>
    %c0_35 = arith.constant 0 : index
    %c2_36 = arith.constant 2 : index
    %c0_37 = arith.constant 0 : index
    %c0_38 = arith.constant 0 : index
    %40 = vector.load %arg10[%c0_35, %c2_36, %c0_37, %c0_38] : memref<1x4x16x128xf32, #tpu.memory_space<vmem>>, vector<1x1x16x128xf32>
    %41 = vector.shape_cast %40 : vector<1x1x16x128xf32> to vector<16x128xf32>
    %42 = vector.broadcast %39 : f32 to vector<16x128xf32>
    %43 = arith.mulf %42, %41 : vector<16x128xf32>
    %44 = arith.addf %38, %43 : vector<16x128xf32>
    %c3_39 = arith.constant 3 : index
    %45 = memref.load %arg8[%c3_39] : memref<4xf32, #tpu.memory_space<smem>>
    %c0_40 = arith.constant 0 : index
    %c3_41 = arith.constant 3 : index
    %c0_42 = arith.constant 0 : index
    %c0_43 = arith.constant 0 : index
    %46 = vector.load %arg10[%c0_40, %c3_41, %c0_42, %c0_43] : memref<1x4x16x128xf32, #tpu.memory_space<vmem>>, vector<1x1x16x128xf32>
    %47 = vector.shape_cast %46 : vector<1x1x16x128xf32> to vector<16x128xf32>
    %48 = vector.broadcast %45 : f32 to vector<16x128xf32>
    %49 = arith.mulf %48, %47 : vector<16x128xf32>
    %50 = arith.addf %44, %49 : vector<16x128xf32>
    %c0_44 = arith.constant 0 : index
    %c0_45 = arith.constant 0 : index
    %51 = memref.load %arg6[%c0_44, %c0_45] : memref<4x4xf32, #tpu.memory_space<smem>>
    %c0_46 = arith.constant 0 : index
    %c0_47 = arith.constant 0 : index
    %c0_48 = arith.constant 0 : index
    %c0_49 = arith.constant 0 : index
    %52 = vector.load %arg10[%c0_46, %c0_47, %c0_48, %c0_49] : memref<1x4x16x128xf32, #tpu.memory_space<vmem>>, vector<1x1x16x128xf32>
    %53 = vector.shape_cast %52 : vector<1x1x16x128xf32> to vector<16x128xf32>
    %54 = vector.broadcast %51 : f32 to vector<16x128xf32>
    %55 = arith.mulf %54, %53 : vector<16x128xf32>
    %c0_50 = arith.constant 0 : index
    %c1_51 = arith.constant 1 : index
    %56 = memref.load %arg6[%c0_50, %c1_51] : memref<4x4xf32, #tpu.memory_space<smem>>
    %c0_52 = arith.constant 0 : index
    %c1_53 = arith.constant 1 : index
    %c0_54 = arith.constant 0 : index
    %c0_55 = arith.constant 0 : index
    %57 = vector.load %arg10[%c0_52, %c1_53, %c0_54, %c0_55] : memref<1x4x16x128xf32, #tpu.memory_space<vmem>>, vector<1x1x16x128xf32>
    %58 = vector.shape_cast %57 : vector<1x1x16x128xf32> to vector<16x128xf32>
    %59 = vector.broadcast %56 : f32 to vector<16x128xf32>
    %60 = arith.mulf %59, %58 : vector<16x128xf32>
    %61 = arith.addf %55, %60 : vector<16x128xf32>
    %c0_56 = arith.constant 0 : index
    %c2_57 = arith.constant 2 : index
    %62 = memref.load %arg6[%c0_56, %c2_57] : memref<4x4xf32, #tpu.memory_space<smem>>
    %c0_58 = arith.constant 0 : index
    %c2_59 = arith.constant 2 : index
    %c0_60 = arith.constant 0 : index
    %c0_61 = arith.constant 0 : index
    %63 = vector.load %arg10[%c0_58, %c2_59, %c0_60, %c0_61] : memref<1x4x16x128xf32, #tpu.memory_space<vmem>>, vector<1x1x16x128xf32>
    %64 = vector.shape_cast %63 : vector<1x1x16x128xf32> to vector<16x128xf32>
    %65 = vector.broadcast %62 : f32 to vector<16x128xf32>
    %66 = arith.mulf %65, %64 : vector<16x128xf32>
    %67 = arith.addf %61, %66 : vector<16x128xf32>
    %c0_62 = arith.constant 0 : index
    %c3_63 = arith.constant 3 : index
    %68 = memref.load %arg6[%c0_62, %c3_63] : memref<4x4xf32, #tpu.memory_space<smem>>
    %c0_64 = arith.constant 0 : index
    %c3_65 = arith.constant 3 : index
    %c0_66 = arith.constant 0 : index
    %c0_67 = arith.constant 0 : index
    %69 = vector.load %arg10[%c0_64, %c3_65, %c0_66, %c0_67] : memref<1x4x16x128xf32, #tpu.memory_space<vmem>>, vector<1x1x16x128xf32>
    %70 = vector.shape_cast %69 : vector<1x1x16x128xf32> to vector<16x128xf32>
    %71 = vector.broadcast %68 : f32 to vector<16x128xf32>
    %72 = arith.mulf %71, %70 : vector<16x128xf32>
    %73 = arith.addf %67, %72 : vector<16x128xf32>
    %c0_68 = arith.constant 0 : index
    %c0_69 = arith.constant 0 : index
    %c0_70 = arith.constant 0 : index
    %c0_71 = arith.constant 0 : index
    %74 = vector.load %arg2[%c0_68, %c0_69, %c0_70, %c0_71] : memref<1x4x16x128xf32, #tpu.memory_space<vmem>>, vector<1x1x16x128xf32>
    %75 = vector.shape_cast %74 : vector<1x1x16x128xf32> to vector<16x128xf32>
    %c0_72 = arith.constant 0 : index
    %76 = memref.load %arg7[%c0_72] : memref<4xf32, #tpu.memory_space<smem>>
    %77 = vector.broadcast %76 : f32 to vector<16x128xf32>
    %78 = arith.addf %73, %77 : vector<16x128xf32>
    %79 = arith.mulf %75, %78 : vector<16x128xf32>
    %80 = arith.addf %50, %79 : vector<16x128xf32>
    %c1_73 = arith.constant 1 : index
    %c0_74 = arith.constant 0 : index
    %81 = memref.load %arg6[%c1_73, %c0_74] : memref<4x4xf32, #tpu.memory_space<smem>>
    %c0_75 = arith.constant 0 : index
    %c0_76 = arith.constant 0 : index
    %c0_77 = arith.constant 0 : index
    %c0_78 = arith.constant 0 : index
    %82 = vector.load %arg10[%c0_75, %c0_76, %c0_77, %c0_78] : memref<1x4x16x128xf32, #tpu.memory_space<vmem>>, vector<1x1x16x128xf32>
    %83 = vector.shape_cast %82 : vector<1x1x16x128xf32> to vector<16x128xf32>
    %84 = vector.broadcast %81 : f32 to vector<16x128xf32>
    %85 = arith.mulf %84, %83 : vector<16x128xf32>
    %c1_79 = arith.constant 1 : index
    %c1_80 = arith.constant 1 : index
    %86 = memref.load %arg6[%c1_79, %c1_80] : memref<4x4xf32, #tpu.memory_space<smem>>
    %c0_81 = arith.constant 0 : index
    %c1_82 = arith.constant 1 : index
    %c0_83 = arith.constant 0 : index
    %c0_84 = arith.constant 0 : index
    %87 = vector.load %arg10[%c0_81, %c1_82, %c0_83, %c0_84] : memref<1x4x16x128xf32, #tpu.memory_space<vmem>>, vector<1x1x16x128xf32>
    %88 = vector.shape_cast %87 : vector<1x1x16x128xf32> to vector<16x128xf32>
    %89 = vector.broadcast %86 : f32 to vector<16x128xf32>
    %90 = arith.mulf %89, %88 : vector<16x128xf32>
    %91 = arith.addf %85, %90 : vector<16x128xf32>
    %c1_85 = arith.constant 1 : index
    %c2_86 = arith.constant 2 : index
    %92 = memref.load %arg6[%c1_85, %c2_86] : memref<4x4xf32, #tpu.memory_space<smem>>
    %c0_87 = arith.constant 0 : index
    %c2_88 = arith.constant 2 : index
    %c0_89 = arith.constant 0 : index
    %c0_90 = arith.constant 0 : index
    %93 = vector.load %arg10[%c0_87, %c2_88, %c0_89, %c0_90] : memref<1x4x16x128xf32, #tpu.memory_space<vmem>>, vector<1x1x16x128xf32>
    %94 = vector.shape_cast %93 : vector<1x1x16x128xf32> to vector<16x128xf32>
    %95 = vector.broadcast %92 : f32 to vector<16x128xf32>
    %96 = arith.mulf %95, %94 : vector<16x128xf32>
    %97 = arith.addf %91, %96 : vector<16x128xf32>
    %c1_91 = arith.constant 1 : index
    %c3_92 = arith.constant 3 : index
    %98 = memref.load %arg6[%c1_91, %c3_92] : memref<4x4xf32, #tpu.memory_space<smem>>
    %c0_93 = arith.constant 0 : index
    %c3_94 = arith.constant 3 : index
    %c0_95 = arith.constant 0 : index
    %c0_96 = arith.constant 0 : index
    %99 = vector.load %arg10[%c0_93, %c3_94, %c0_95, %c0_96] : memref<1x4x16x128xf32, #tpu.memory_space<vmem>>, vector<1x1x16x128xf32>
    %100 = vector.shape_cast %99 : vector<1x1x16x128xf32> to vector<16x128xf32>
    %101 = vector.broadcast %98 : f32 to vector<16x128xf32>
    %102 = arith.mulf %101, %100 : vector<16x128xf32>
    %103 = arith.addf %97, %102 : vector<16x128xf32>
    %c0_97 = arith.constant 0 : index
    %c1_98 = arith.constant 1 : index
    %c0_99 = arith.constant 0 : index
    %c0_100 = arith.constant 0 : index
    %104 = vector.load %arg2[%c0_97, %c1_98, %c0_99, %c0_100] : memref<1x4x16x128xf32, #tpu.memory_space<vmem>>, vector<1x1x16x128xf32>
    %105 = vector.shape_cast %104 : vector<1x1x16x128xf32> to vector<16x128xf32>
    %c1_101 = arith.constant 1 : index
    %106 = memref.load %arg7[%c1_101] : memref<4xf32, #tpu.memory_space<smem>>
    %107 = vector.broadcast %106 : f32 to vector<16x128xf32>
    %108 = arith.addf %103, %107 : vector<16x128xf32>
    %109 = arith.mulf %105, %108 : vector<16x128xf32>
    %110 = arith.addf %80, %109 : vector<16x128xf32>
    %c2_102 = arith.constant 2 : index
    %c0_103 = arith.constant 0 : index
    %111 = memref.load %arg6[%c2_102, %c0_103] : memref<4x4xf32, #tpu.memory_space<smem>>
    %c0_104 = arith.constant 0 : index
    %c0_105 = arith.constant 0 : index
    %c0_106 = arith.constant 0 : index
    %c0_107 = arith.constant 0 : index
    %112 = vector.load %arg10[%c0_104, %c0_105, %c0_106, %c0_107] : memref<1x4x16x128xf32, #tpu.memory_space<vmem>>, vector<1x1x16x128xf32>
    %113 = vector.shape_cast %112 : vector<1x1x16x128xf32> to vector<16x128xf32>
    %114 = vector.broadcast %111 : f32 to vector<16x128xf32>
    %115 = arith.mulf %114, %113 : vector<16x128xf32>
    %c2_108 = arith.constant 2 : index
    %c1_109 = arith.constant 1 : index
    %116 = memref.load %arg6[%c2_108, %c1_109] : memref<4x4xf32, #tpu.memory_space<smem>>
    %c0_110 = arith.constant 0 : index
    %c1_111 = arith.constant 1 : index
    %c0_112 = arith.constant 0 : index
    %c0_113 = arith.constant 0 : index
    %117 = vector.load %arg10[%c0_110, %c1_111, %c0_112, %c0_113] : memref<1x4x16x128xf32, #tpu.memory_space<vmem>>, vector<1x1x16x128xf32>
    %118 = vector.shape_cast %117 : vector<1x1x16x128xf32> to vector<16x128xf32>
    %119 = vector.broadcast %116 : f32 to vector<16x128xf32>
    %120 = arith.mulf %119, %118 : vector<16x128xf32>
    %121 = arith.addf %115, %120 : vector<16x128xf32>
    %c2_114 = arith.constant 2 : index
    %c2_115 = arith.constant 2 : index
    %122 = memref.load %arg6[%c2_114, %c2_115] : memref<4x4xf32, #tpu.memory_space<smem>>
    %c0_116 = arith.constant 0 : index
    %c2_117 = arith.constant 2 : index
    %c0_118 = arith.constant 0 : index
    %c0_119 = arith.constant 0 : index
    %123 = vector.load %arg10[%c0_116, %c2_117, %c0_118, %c0_119] : memref<1x4x16x128xf32, #tpu.memory_space<vmem>>, vector<1x1x16x128xf32>
    %124 = vector.shape_cast %123 : vector<1x1x16x128xf32> to vector<16x128xf32>
    %125 = vector.broadcast %122 : f32 to vector<16x128xf32>
    %126 = arith.mulf %125, %124 : vector<16x128xf32>
    %127 = arith.addf %121, %126 : vector<16x128xf32>
    %c2_120 = arith.constant 2 : index
    %c3_121 = arith.constant 3 : index
    %128 = memref.load %arg6[%c2_120, %c3_121] : memref<4x4xf32, #tpu.memory_space<smem>>
    %c0_122 = arith.constant 0 : index
    %c3_123 = arith.constant 3 : index
    %c0_124 = arith.constant 0 : index
    %c0_125 = arith.constant 0 : index
    %129 = vector.load %arg10[%c0_122, %c3_123, %c0_124, %c0_125] : memref<1x4x16x128xf32, #tpu.memory_space<vmem>>, vector<1x1x16x128xf32>
    %130 = vector.shape_cast %129 : vector<1x1x16x128xf32> to vector<16x128xf32>
    %131 = vector.broadcast %128 : f32 to vector<16x128xf32>
    %132 = arith.mulf %131, %130 : vector<16x128xf32>
    %133 = arith.addf %127, %132 : vector<16x128xf32>
    %c0_126 = arith.constant 0 : index
    %c2_127 = arith.constant 2 : index
    %c0_128 = arith.constant 0 : index
    %c0_129 = arith.constant 0 : index
    %134 = vector.load %arg2[%c0_126, %c2_127, %c0_128, %c0_129] : memref<1x4x16x128xf32, #tpu.memory_space<vmem>>, vector<1x1x16x128xf32>
    %135 = vector.shape_cast %134 : vector<1x1x16x128xf32> to vector<16x128xf32>
    %c2_130 = arith.constant 2 : index
    %136 = memref.load %arg7[%c2_130] : memref<4xf32, #tpu.memory_space<smem>>
    %137 = vector.broadcast %136 : f32 to vector<16x128xf32>
    %138 = arith.addf %133, %137 : vector<16x128xf32>
    %139 = arith.mulf %135, %138 : vector<16x128xf32>
    %140 = arith.addf %110, %139 : vector<16x128xf32>
    %c3_131 = arith.constant 3 : index
    %c0_132 = arith.constant 0 : index
    %141 = memref.load %arg6[%c3_131, %c0_132] : memref<4x4xf32, #tpu.memory_space<smem>>
    %c0_133 = arith.constant 0 : index
    %c0_134 = arith.constant 0 : index
    %c0_135 = arith.constant 0 : index
    %c0_136 = arith.constant 0 : index
    %142 = vector.load %arg10[%c0_133, %c0_134, %c0_135, %c0_136] : memref<1x4x16x128xf32, #tpu.memory_space<vmem>>, vector<1x1x16x128xf32>
    %143 = vector.shape_cast %142 : vector<1x1x16x128xf32> to vector<16x128xf32>
    %144 = vector.broadcast %141 : f32 to vector<16x128xf32>
    %145 = arith.mulf %144, %143 : vector<16x128xf32>
    %c3_137 = arith.constant 3 : index
    %c1_138 = arith.constant 1 : index
    %146 = memref.load %arg6[%c3_137, %c1_138] : memref<4x4xf32, #tpu.memory_space<smem>>
    %c0_139 = arith.constant 0 : index
    %c1_140 = arith.constant 1 : index
    %c0_141 = arith.constant 0 : index
    %c0_142 = arith.constant 0 : index
    %147 = vector.load %arg10[%c0_139, %c1_140, %c0_141, %c0_142] : memref<1x4x16x128xf32, #tpu.memory_space<vmem>>, vector<1x1x16x128xf32>
    %148 = vector.shape_cast %147 : vector<1x1x16x128xf32> to vector<16x128xf32>
    %149 = vector.broadcast %146 : f32 to vector<16x128xf32>
    %150 = arith.mulf %149, %148 : vector<16x128xf32>
    %151 = arith.addf %145, %150 : vector<16x128xf32>
    %c3_143 = arith.constant 3 : index
    %c2_144 = arith.constant 2 : index
    %152 = memref.load %arg6[%c3_143, %c2_144] : memref<4x4xf32, #tpu.memory_space<smem>>
    %c0_145 = arith.constant 0 : index
    %c2_146 = arith.constant 2 : index
    %c0_147 = arith.constant 0 : index
    %c0_148 = arith.constant 0 : index
    %153 = vector.load %arg10[%c0_145, %c2_146, %c0_147, %c0_148] : memref<1x4x16x128xf32, #tpu.memory_space<vmem>>, vector<1x1x16x128xf32>
    %154 = vector.shape_cast %153 : vector<1x1x16x128xf32> to vector<16x128xf32>
    %155 = vector.broadcast %152 : f32 to vector<16x128xf32>
    %156 = arith.mulf %155, %154 : vector<16x128xf32>
    %157 = arith.addf %151, %156 : vector<16x128xf32>
    %c3_149 = arith.constant 3 : index
    %c3_150 = arith.constant 3 : index
    %158 = memref.load %arg6[%c3_149, %c3_150] : memref<4x4xf32, #tpu.memory_space<smem>>
    %c0_151 = arith.constant 0 : index
    %c3_152 = arith.constant 3 : index
    %c0_153 = arith.constant 0 : index
    %c0_154 = arith.constant 0 : index
    %159 = vector.load %arg10[%c0_151, %c3_152, %c0_153, %c0_154] : memref<1x4x16x128xf32, #tpu.memory_space<vmem>>, vector<1x1x16x128xf32>
    %160 = vector.shape_cast %159 : vector<1x1x16x128xf32> to vector<16x128xf32>
    %161 = vector.broadcast %158 : f32 to vector<16x128xf32>
    %162 = arith.mulf %161, %160 : vector<16x128xf32>
    %163 = arith.addf %157, %162 : vector<16x128xf32>
    %c0_155 = arith.constant 0 : index
    %c3_156 = arith.constant 3 : index
    %c0_157 = arith.constant 0 : index
    %c0_158 = arith.constant 0 : index
    %164 = vector.load %arg2[%c0_155, %c3_156, %c0_157, %c0_158] : memref<1x4x16x128xf32, #tpu.memory_space<vmem>>, vector<1x1x16x128xf32>
    %165 = vector.shape_cast %164 : vector<1x1x16x128xf32> to vector<16x128xf32>
    %c3_159 = arith.constant 3 : index
    %166 = memref.load %arg7[%c3_159] : memref<4xf32, #tpu.memory_space<smem>>
    %167 = vector.broadcast %166 : f32 to vector<16x128xf32>
    %168 = arith.addf %163, %167 : vector<16x128xf32>
    %169 = arith.mulf %165, %168 : vector<16x128xf32>
    %170 = arith.addf %140, %169 : vector<16x128xf32>
    %171 = arith.negf %170 : vector<16x128xf32>
    %172 = math.exp %171 : vector<16x128xf32>
    %cst_160 = arith.constant 1.000000e+00 : f32
    %173 = vector.broadcast %cst_160 : f32 to vector<16x128xf32>
    %174 = arith.addf %173, %172 : vector<16x128xf32>
    %175 = arith.divf %173, %174 : vector<16x128xf32>
    %c0_161 = arith.constant 0 : index
    %c0_162 = arith.constant 0 : index
    %c0_163 = arith.constant 0 : index
    %c0_164 = arith.constant 0 : index
    %176 = vector.load %arg2[%c0_161, %c0_162, %c0_163, %c0_164] : memref<1x4x16x128xf32, #tpu.memory_space<vmem>>, vector<1x1x16x128xf32>
    %177 = vector.shape_cast %176 : vector<1x1x16x128xf32> to vector<16x128xf32>
    %c0_165 = arith.constant 0 : index
    %c0_166 = arith.constant 0 : index
    %c0_167 = arith.constant 0 : index
    %c0_168 = arith.constant 0 : index
    %178 = vector.load %arg10[%c0_165, %c0_166, %c0_167, %c0_168] : memref<1x4x16x128xf32, #tpu.memory_space<vmem>>, vector<1x1x16x128xf32>
    %179 = vector.shape_cast %178 : vector<1x1x16x128xf32> to vector<16x128xf32>
    %180 = arith.subf %179, %177 : vector<16x128xf32>
    %181 = arith.mulf %175, %180 : vector<16x128xf32>
    %182 = arith.addf %177, %181 : vector<16x128xf32>
    %c0_169 = arith.constant 0 : index
    %c0_170 = arith.constant 0 : index
    %c0_171 = arith.constant 0 : index
    %c0_172 = arith.constant 0 : index
    %183 = vector.load %arg10[%c0_169, %c0_170, %c0_171, %c0_172] : memref<1x4x16x128xf32, #tpu.memory_space<vmem>>, vector<1x1x16x128xf32>
    %184 = vector.shape_cast %183 : vector<1x1x16x128xf32> to vector<16x128xf32>
    %185 = vector.shape_cast %182 : vector<16x128xf32> to vector<1x1x16x128xf32>
    tpu.vector_store %arg10[%c0_169, %c0_170, %c0_171, %c0_172], %185 {strides = array<i32>} : memref<1x4x16x128xf32, #tpu.memory_space<vmem>>, vector<1x1x16x128xf32>,
    %c0_173 = arith.constant 0 : index
    %c1_174 = arith.constant 1 : index
    %c0_175 = arith.constant 0 : index
    %c0_176 = arith.constant 0 : index
    %186 = vector.load %arg2[%c0_173, %c1_174, %c0_175, %c0_176] : memref<1x4x16x128xf32, #tpu.memory_space<vmem>>, vector<1x1x16x128xf32>
    %187 = vector.shape_cast %186 : vector<1x1x16x128xf32> to vector<16x128xf32>
    %c0_177 = arith.constant 0 : index
    %c1_178 = arith.constant 1 : index
    %c0_179 = arith.constant 0 : index
    %c0_180 = arith.constant 0 : index
    %188 = vector.load %arg10[%c0_177, %c1_178, %c0_179, %c0_180] : memref<1x4x16x128xf32, #tpu.memory_space<vmem>>, vector<1x1x16x128xf32>
    %189 = vector.shape_cast %188 : vector<1x1x16x128xf32> to vector<16x128xf32>
    %190 = arith.subf %189, %187 : vector<16x128xf32>
    %191 = arith.mulf %175, %190 : vector<16x128xf32>
    %192 = arith.addf %187, %191 : vector<16x128xf32>
    %c0_181 = arith.constant 0 : index
    %c1_182 = arith.constant 1 : index
    %c0_183 = arith.constant 0 : index
    %c0_184 = arith.constant 0 : index
    %193 = vector.load %arg10[%c0_181, %c1_182, %c0_183, %c0_184] : memref<1x4x16x128xf32, #tpu.memory_space<vmem>>, vector<1x1x16x128xf32>
    %194 = vector.shape_cast %193 : vector<1x1x16x128xf32> to vector<16x128xf32>
    %195 = vector.shape_cast %192 : vector<16x128xf32> to vector<1x1x16x128xf32>
    tpu.vector_store %arg10[%c0_181, %c1_182, %c0_183, %c0_184], %195 {strides = array<i32>} : memref<1x4x16x128xf32, #tpu.memory_space<vmem>>, vector<1x1x16x128xf32>,
    %c0_185 = arith.constant 0 : index
    %c2_186 = arith.constant 2 : index
    %c0_187 = arith.constant 0 : index
    %c0_188 = arith.constant 0 : index
    %196 = vector.load %arg2[%c0_185, %c2_186, %c0_187, %c0_188] : memref<1x4x16x128xf32, #tpu.memory_space<vmem>>, vector<1x1x16x128xf32>
    %197 = vector.shape_cast %196 : vector<1x1x16x128xf32> to vector<16x128xf32>
    %c0_189 = arith.constant 0 : index
    %c2_190 = arith.constant 2 : index
    %c0_191 = arith.constant 0 : index
    %c0_192 = arith.constant 0 : index
    %198 = vector.load %arg10[%c0_189, %c2_190, %c0_191, %c0_192] : memref<1x4x16x128xf32, #tpu.memory_space<vmem>>, vector<1x1x16x128xf32>
    %199 = vector.shape_cast %198 : vector<1x1x16x128xf32> to vector<16x128xf32>
    %200 = arith.subf %199, %197 : vector<16x128xf32>
    %201 = arith.mulf %175, %200 : vector<16x128xf32>
    %202 = arith.addf %197, %201 : vector<16x128xf32>
    %c0_193 = arith.constant 0 : index
    %c2_194 = arith.constant 2 : index
    %c0_195 = arith.constant 0 : index
    %c0_196 = arith.constant 0 : index
    %203 = vector.load %arg10[%c0_193, %c2_194, %c0_195, %c0_196] : memref<1x4x16x128xf32, #tpu.memory_space<vmem>>, vector<1x1x16x128xf32>
    %204 = vector.shape_cast %203 : vector<1x1x16x128xf32> to vector<16x128xf32>
    %205 = vector.shape_cast %202 : vector<16x128xf32> to vector<1x1x16x128xf32>
    tpu.vector_store %arg10[%c0_193, %c2_194, %c0_195, %c0_196], %205 {strides = array<i32>} : memref<1x4x16x128xf32, #tpu.memory_space<vmem>>, vector<1x1x16x128xf32>,
    %c0_197 = arith.constant 0 : index
    %c3_198 = arith.constant 3 : index
    %c0_199 = arith.constant 0 : index
    %c0_200 = arith.constant 0 : index
    %206 = vector.load %arg2[%c0_197, %c3_198, %c0_199, %c0_200] : memref<1x4x16x128xf32, #tpu.memory_space<vmem>>, vector<1x1x16x128xf32>
    %207 = vector.shape_cast %206 : vector<1x1x16x128xf32> to vector<16x128xf32>
    %c0_201 = arith.constant 0 : index
    %c3_202 = arith.constant 3 : index
    %c0_203 = arith.constant 0 : index
    %c0_204 = arith.constant 0 : index
    %208 = vector.load %arg10[%c0_201, %c3_202, %c0_203, %c0_204] : memref<1x4x16x128xf32, #tpu.memory_space<vmem>>, vector<1x1x16x128xf32>
    %209 = vector.shape_cast %208 : vector<1x1x16x128xf32> to vector<16x128xf32>
    %210 = arith.subf %209, %207 : vector<16x128xf32>
    %211 = arith.mulf %175, %210 : vector<16x128xf32>
    %212 = arith.addf %207, %211 : vector<16x128xf32>
    %c0_205 = arith.constant 0 : index
    %c3_206 = arith.constant 3 : index
    %c0_207 = arith.constant 0 : index
    %c0_208 = arith.constant 0 : index
    %213 = vector.load %arg10[%c0_205, %c3_206, %c0_207, %c0_208] : memref<1x4x16x128xf32, #tpu.memory_space<vmem>>, vector<1x1x16x128xf32>
    %214 = vector.shape_cast %213 : vector<1x1x16x128xf32> to vector<16x128xf32>
    %215 = vector.shape_cast %212 : vector<16x128xf32> to vector<1x1x16x128xf32>
    tpu.vector_store %arg10[%c0_205, %c3_206, %c0_207, %c0_208], %215 {strides = array<i32>} : memref<1x4x16x128xf32, #tpu.memory_space<vmem>>, vector<1x1x16x128xf32>,
    return
  }
  func.func @transform_0(%arg0: i32, %arg1: i32) -> (i32, i32, i32, i32) {
    %c0_i32 = arith.constant 0 : i32
    %c0_i32_0 = arith.constant 0 : i32
    %c0_i32_1 = arith.constant 0 : i32
    return %arg0, %c0_i32, %arg1, %c0_i32_0 : i32, i32, i32, i32
  }
  func.func @transform_1(%arg0: i32, %arg1: i32) -> (i32, i32, i32) {
    %c0_i32 = arith.constant 0 : i32
    %c0_i32_0 = arith.constant 0 : i32
    %c0_i32_1 = arith.constant 0 : i32
    return %arg0, %c0_i32, %c0_i32_0 : i32, i32, i32
  }
  func.func @transform_2(%arg0: i32, %arg1: i32) -> (i32, i32) {
    %c0_i32 = arith.constant 0 : i32
    %c0_i32_0 = arith.constant 0 : i32
    return %arg1, %c0_i32 : i32, i32
  }
  func.func @transform_3(%arg0: i32, %arg1: i32) -> (i32, i32) {
    %c0_i32 = arith.constant 0 : i32
    %c0_i32_0 = arith.constant 0 : i32
    %c0_i32_1 = arith.constant 0 : i32
    return %c0_i32, %c0_i32_0 : i32, i32
  }
  func.func @transform_4(%arg0: i32, %arg1: i32) -> (i32, i32) {
    %c0_i32 = arith.constant 0 : i32
    %c0_i32_0 = arith.constant 0 : i32
    %c0_i32_1 = arith.constant 0 : i32
    return %c0_i32, %c0_i32_0 : i32, i32
  }
  func.func @transform_5(%arg0: i32, %arg1: i32) -> i32 {
    %c0_i32 = arith.constant 0 : i32
    %c0_i32_0 = arith.constant 0 : i32
    return %c0_i32 : i32
  }
  func.func @transform_6(%arg0: i32, %arg1: i32) -> i32 {
    %c0_i32 = arith.constant 0 : i32
    %c0_i32_0 = arith.constant 0 : i32
    return %c0_i32 : i32
  }
  func.func @transform_7(%arg0: i32, %arg1: i32) -> i32 {
    %c0_i32 = arith.constant 0 : i32
    %c0_i32_0 = arith.constant 0 : i32
    return %c0_i32 : i32
  }
  func.func @transform_8(%arg0: i32, %arg1: i32) -> (i32, i32, i32, i32) {
    %c0_i32 = arith.constant 0 : i32
    %c0_i32_0 = arith.constant 0 : i32
    %c0_i32_1 = arith.constant 0 : i32
    return %arg0, %c0_i32, %arg1, %c0_i32_0 : i32, i32, i32, i32
  }
}

</mosaic_0001>

<llo_original>
// kernel: tpu_custom_call.1
$region0: #{tpu_custom_call.1}
  #allocation0 [shape = 'u32[]', space=smem, size = 0x4, offset = 0x4, fixed_abs, tag = 'smem constant byte address 0x4 - core index']
  #allocation1 [shape = 'u32[144,128]{1,0:T(1,128)}', space=vmem, size = 0x12000, scoped, tag = 'internal scratch']
  #allocation2 [shape = 'f32[1]{0:T(128)S(6)}', space=smem, size = 0x200, scoped, tag = 'scoped memory for tpu_custom_call.1']
  %s0 = inlined_call_operand.hbm [shape: f32[2,4,16,128], index: 0, kind: input, shape index: {}]
  %s1 = inlined_call_operand.vmem [shape: f32[2,32,8], index: 1, kind: input, shape index: {}]
  %s2 = inlined_call_operand.vmem [shape: f32[16,8], index: 2, kind: input, shape index: {}]
  %s3 = inlined_call_operand.vmem [shape: f32[8,128], index: 3, kind: input, shape index: {}]
  %s4 = inlined_call_operand.vmem [shape: f32[4,4], index: 4, kind: input, shape index: {}]
  %s5 = inlined_call_operand.vmem [shape: f32[4], index: 5, kind: input, shape index: {}]
  %s6 = inlined_call_operand.vmem [shape: f32[4], index: 6, kind: input, shape index: {}]
  %s7 = inlined_call_operand.<no memory space> [shape: f32[1], index: 7, kind: input, shape index: {}]
  %s8 = inlined_call_operand.hbm [shape: f32[2,4,16,128], index: 8, kind: output, shape index: {}]
  %s9 = sld [smem:[#allocation0]]
  $region81: #{tpu_custom_call.1} parent=0
    _
  %s11 = ssub.s32 1, %s9
  %s12 = scalar_select 0, %s11, %s9
  %13 = sst [smem:[#allocation2]] %s7
  $region1: #{tpu_custom_call.1} parent=0
    #allocation3 [shape = 'u8[65536]{0}', space=vmem, size = 0x10000, scoped, tag = 'input window, operand 0']
    #allocation4 [shape = 's32[2]{0}', space=sflag, size = 0x8, scoped, tag = 'scoped memory for tpu_custom_call.1']
    #allocation5 [shape = 's32[2]{0}', space=sflag, size = 0x8, scoped, tag = 'scoped memory for tpu_custom_call.1']
    #allocation6 [shape = 's32[2]{0}', space=sflag, size = 0x8, scoped, tag = 'scoped memory for tpu_custom_call.1']
    #allocation7 [shape = 'u8[2048]{0}', space=smem, size = 0x800, scoped, tag = 'input window, operand 4, single buffered']
    #allocation8 [shape = 'u8[512]{0}', space=smem, size = 0x200, scoped, tag = 'input window, operand 5, single buffered']
    #allocation9 [shape = 's32[1]{0}', space=sflag, size = 0x4, scoped, tag = 'scoped memory for tpu_custom_call.1']
    #allocation10 [shape = 'u8[512]{0}', space=smem, size = 0x200, scoped, tag = 'input window, operand 6, single buffered']
    #allocation11 [shape = 'u8[65536]{0}', space=vmem, size = 0x10000, scoped, tag = 'output window, operand 0']
    %14 = vsyncpa [#allocation4], 0
    %s15 = scalar_lea.sflag [#allocation4], 1
    %16 = vsyncpa %s15, 0
    %17 = vsyncpa [#allocation6], 0
    %18 = vsyncpa [#allocation9], 0
    %19 = vsyncpa [#allocation5], 0
    %s20 = scalar_lea.sflag [#allocation5], 1
    %21 = vsyncpa %s20, 0
    loop: start=0, step=1, limit=4
    $region2: #{tpu_custom_call.1} parent=1 // loop_pre_header
      _
    $region3: #{tpu_custom_call.1} parent=1 // loop_header
      %s23 = sphi 0, %s27
      %p24 = scmp.ge.s32.totalorder %s23, 4
      %s30 = sphi 0, %s42
      %s31 = sphi 0, %s38
      %s32 = sphi 0, %s30
      %s33 = sphi 0, %s31
      %s34 = sphi 0, %s32
      %s35 = sphi 0, %s33
      %s47 = sphi 0, %s49
      %s50 = sphi 0, %s47
      %s51 = sphi 0, %s50
      %s67 = sphi 0, %s51
      %s73 = sphi 0, %s75
      %s76 = sphi 0, %s73
      %s77 = sphi 0, %s76
      %s93 = sphi 0, %s77
      %s99 = sphi 0, %s101
      %s102 = sphi 0, %s99
      %s103 = sphi 0, %s102
      %s119 = sphi 0, %s103
      %s123 = sphi 0, %s123
      %s125 = sphi 0, %s123
      %s126 = sphi 0, %s125
      %s140 = sphi 0, %s126
      %s144 = sphi 0, %s144
      %s146 = sphi 0, %s144
      %s147 = sphi 0, %s146
      %s161 = sphi 0, %s147
      %s165 = sphi 0, %s165
      %s167 = sphi 0, %s165
      %s168 = sphi 0, %s167
      %s182 = sphi 0, %s168
      %s186 = sphi 0, %s186
      %s188 = sphi 0, %s186
      %s189 = sphi 0, %s188
      %s203 = sphi 0, %s189
      %s207 = sphi 0, %s207
      %s209 = sphi 0, %s207
      %s210 = sphi 0, %s209
      %s224 = sphi 0, %s210
      %s232 = sphi 0, %s234
      %s235 = sphi 0, %s232
      %s236 = sphi 0, %s235
      %s252 = sphi 0, %s236
    $region4: #{tpu_custom_call.1} parent=1 // loop_header_branch
      %26 = sbr.rel (%p24) target = $region8
    $region5: #{tpu_custom_call.1} parent=1 // loop_body
      %s28 = ssub.s32 %s23, 1
      %s29 = ssub.s32 %s23, 2
      %s36 = sadd.s32 1, %s31
      %p37 = scmp.ge.s32.totalorder %s36, 1
      %s38 = scalar_select %p37, 0, %s36
      %s39 = sadd.s32 1, %s30
      %s40 = scalar_select %p37, %s39, %s30
      %p41 = scmp.ge.s32.totalorder %s40, 2
      %s42 = scalar_select %p41, 0, %s40
      %s43 = ssub.s32 %s30, %s42
      %s44 = ssub.s32 %s31, %s38
      %s45 = sor.u32 %s43, %s44
      %p46 = scmp.eq.s32.totalorder %s45, 0
      %s48 = sadd.s32 %s47, 1
      %s49 = scalar_select %p46, %s47, %s48
      %p52 = pneg %p46
      %p53 = scmp.eq.s32.totalorder %s23, 1
      %p54 = por %p52, %p53
      %p55 = scmp.ne.s32.totalorder %s47, %s50
      %p56 = scmp.eq.s32.totalorder %s23, 0
      %p57 = por %p55, %p56
      %p58 = scmp.ne.s32.totalorder %s47, %s50
      %p59 = scmp.eq.s32.totalorder %s28, 1
      %p60 = por %p58, %p59
      %p61 = scmp.ne.s32.totalorder %s50, %s51
      %p62 = scmp.eq.s32.totalorder %s28, 0
      %p63 = por %p61, %p62
      %p64 = scmp.ne.s32.totalorder %s50, %s51
      %p65 = scmp.eq.s32.totalorder %s29, 1
      %p66 = por %p64, %p65
      %p68 = scmp.ne.s32.totalorder %s51, %s67
      %p69 = scmp.eq.s32.totalorder %s29, 0
      %p70 = por %p68, %p69
      %s71 = ssub.s32 %s30, %s42
      %p72 = scmp.eq.s32.totalorder %s71, 0
      %s74 = sadd.s32 %s73, 1
      %s75 = scalar_select %p72, %s73, %s74
      %p78 = pneg %p72
      %p79 = scmp.eq.s32.totalorder %s23, 1
      %p80 = por %p78, %p79
      %p81 = scmp.ne.s32.totalorder %s73, %s76
      %p82 = scmp.eq.s32.totalorder %s23, 0
      %p83 = por %p81, %p82
      %p84 = scmp.ne.s32.totalorder %s73, %s76
      %p85 = scmp.eq.s32.totalorder %s28, 1
      %p86 = por %p84, %p85
      %p87 = scmp.ne.s32.totalorder %s76, %s77
      %p88 = scmp.eq.s32.totalorder %s28, 0
      %p89 = por %p87, %p88
      %p90 = scmp.ne.s32.totalorder %s76, %s77
      %p91 = scmp.eq.s32.totalorder %s29, 1
      %p92 = por %p90, %p91
      %p94 = scmp.ne.s32.totalorder %s77, %s93
      %p95 = scmp.eq.s32.totalorder %s29, 0
      %p96 = por %p94, %p95
      %s97 = ssub.s32 %s31, %s38
      %p98 = scmp.eq.s32.totalorder %s97, 0
      %s100 = sadd.s32 %s99, 1
      %s101 = scalar_select %p98, %s99, %s100
      %p104 = pneg %p98
      %p105 = scmp.eq.s32.totalorder %s23, 1
      %p106 = por %p104, %p105
      %p107 = scmp.ne.s32.totalorder %s99, %s102
      %p108 = scmp.eq.s32.totalorder %s23, 0
      %p109 = por %p107, %p108
      %p110 = scmp.ne.s32.totalorder %s99, %s102
      %p111 = scmp.eq.s32.totalorder %s28, 1
      %p112 = por %p110, %p111
      %p113 = scmp.ne.s32.totalorder %s102, %s103
      %p114 = scmp.eq.s32.totalorder %s28, 0
      %p115 = por %p113, %p114
      %p116 = scmp.ne.s32.totalorder %s102, %s103
      %p117 = scmp.eq.s32.totalorder %s29, 1
      %p118 = por %p116, %p117
      %p120 = scmp.ne.s32.totalorder %s103, %s119
      %p121 = scmp.eq.s32.totalorder %s29, 0
      %p122 = por %p120, %p121
      %s124 = sadd.s32 %s123, 1
      %p127 = scmp.eq.s32.totalorder %s23, 1
      %p128 = scmp.ne.s32.totalorder %s123, %s125
      %p129 = scmp.eq.s32.totalorder %s23, 0
      %p130 = por %p128, %p129
      %p131 = scmp.ne.s32.totalorder %s123, %s125
      %p132 = scmp.eq.s32.totalorder %s28, 1
      %p133 = por %p131, %p132
      %p134 = scmp.ne.s32.totalorder %s125, %s126
      %p135 = scmp.eq.s32.totalorder %s28, 0
      %p136 = por %p134, %p135
      %p137 = scmp.ne.s32.totalorder %s125, %s126
      %p138 = scmp.eq.s32.totalorder %s29, 1
      %p139 = por %p137, %p138
      %p141 = scmp.ne.s32.totalorder %s126, %s140
      %p142 = scmp.eq.s32.totalorder %s29, 0
      %p143 = por %p141, %p142
      %s145 = sadd.s32 %s144, 1
      %p148 = scmp.eq.s32.totalorder %s23, 1
      %p149 = scmp.ne.s32.totalorder %s144, %s146
      %p150 = scmp.eq.s32.totalorder %s23, 0
      %p151 = por %p149, %p150
      %p152 = scmp.ne.s32.totalorder %s144, %s146
      %p153 = scmp.eq.s32.totalorder %s28, 1
      %p154 = por %p152, %p153
      %p155 = scmp.ne.s32.totalorder %s146, %s147
      %p156 = scmp.eq.s32.totalorder %s28, 0
      %p157 = por %p155, %p156
      %p158 = scmp.ne.s32.totalorder %s146, %s147
      %p159 = scmp.eq.s32.totalorder %s29, 1
      %p160 = por %p158, %p159
      %p162 = scmp.ne.s32.totalorder %s147, %s161
      %p163 = scmp.eq.s32.totalorder %s29, 0
      %p164 = por %p162, %p163
      %s166 = sadd.s32 %s165, 1
      %p169 = scmp.eq.s32.totalorder %s23, 1
      %p170 = scmp.ne.s32.totalorder %s165, %s167
      %p171 = scmp.eq.s32.totalorder %s23, 0
      %p172 = por %p170, %p171
      %p173 = scmp.ne.s32.totalorder %s165, %s167
      %p174 = scmp.eq.s32.totalorder %s28, 1
      %p175 = por %p173, %p174
      %p176 = scmp.ne.s32.totalorder %s167, %s168
      %p177 = scmp.eq.s32.totalorder %s28, 0
      %p178 = por %p176, %p177
      %p179 = scmp.ne.s32.totalorder %s167, %s168
      %p180 = scmp.eq.s32.totalorder %s29, 1
      %p181 = por %p179, %p180
      %p183 = scmp.ne.s32.totalorder %s168, %s182
      %p184 = scmp.eq.s32.totalorder %s29, 0
      %p185 = por %p183, %p184
      %s187 = sadd.s32 %s186, 1
      %p190 = scmp.eq.s32.totalorder %s23, 1
      %p191 = scmp.ne.s32.totalorder %s186, %s188
      %p192 = scmp.eq.s32.totalorder %s23, 0
      %p193 = por %p191, %p192
      %p194 = scmp.ne.s32.totalorder %s186, %s188
      %p195 = scmp.eq.s32.totalorder %s28, 1
      %p196 = por %p194, %p195
      %p197 = scmp.ne.s32.totalorder %s188, %s189
      %p198 = scmp.eq.s32.totalorder %s28, 0
      %p199 = por %p197, %p198
      %p200 = scmp.ne.s32.totalorder %s188, %s189
      %p201 = scmp.eq.s32.totalorder %s29, 1
      %p202 = por %p200, %p201
      %p204 = scmp.ne.s32.totalorder %s189, %s203
      %p205 = scmp.eq.s32.totalorder %s29, 0
      %p206 = por %p204, %p205
      %s208 = sadd.s32 %s207, 1
      %p211 = scmp.eq.s32.totalorder %s23, 1
      %p212 = scmp.ne.s32.totalorder %s207, %s209
      %p213 = scmp.eq.s32.totalorder %s23, 0
      %p214 = por %p212, %p213
      %p215 = scmp.ne.s32.totalorder %s207, %s209
      %p216 = scmp.eq.s32.totalorder %s28, 1
      %p217 = por %p215, %p216
      %p218 = scmp.ne.s32.totalorder %s209, %s210
      %p219 = scmp.eq.s32.totalorder %s28, 0
      %p220 = por %p218, %p219
      %p221 = scmp.ne.s32.totalorder %s209, %s210
      %p222 = scmp.eq.s32.totalorder %s29, 1
      %p223 = por %p221, %p222
      %p225 = scmp.ne.s32.totalorder %s210, %s224
      %p226 = scmp.eq.s32.totalorder %s29, 0
      %p227 = por %p225, %p226
      %s228 = ssub.s32 %s30, %s42
      %s229 = ssub.s32 %s31, %s38
      %s230 = sor.u32 %s228, %s229
      %p231 = scmp.eq.s32.totalorder %s230, 0
      %s233 = sadd.s32 %s232, 1
      %s234 = scalar_select %p231, %s232, %s233
      %p237 = pneg %p231
      %p238 = scmp.eq.s32.totalorder %s23, 1
      %p239 = por %p237, %p238
      %p240 = scmp.ne.s32.totalorder %s232, %s235
      %p241 = scmp.eq.s32.totalorder %s23, 0
      %p242 = por %p240, %p241
      %p243 = scmp.ne.s32.totalorder %s232, %s235
      %p244 = scmp.eq.s32.totalorder %s28, 1
      %p245 = por %p243, %p244
      %p246 = scmp.ne.s32.totalorder %s235, %s236
      %p247 = scmp.eq.s32.totalorder %s28, 0
      %p248 = por %p246, %p247
      %p249 = scmp.ne.s32.totalorder %s235, %s236
      %p250 = scmp.eq.s32.totalorder %s29, 1
      %p251 = por %p249, %p250
      %p253 = scmp.ne.s32.totalorder %s236, %s252
      %p254 = scmp.eq.s32.totalorder %s29, 0
      %p255 = por %p253, %p254
      %p256 = scmp.le.s32.totalorder 1, %s23
      %p257 = scmp.lt.s32.totalorder %s23, 3
      %p258 = pnand %p256, %p257
      %p259 = pneg %p258
      // Predicated region
      $region9: #{tpu_custom_call.1} parent=5 // pred_check
        _
      $region10: #{tpu_custom_call.1} parent=5 // pred_check_branch
        %261 = sbr.rel (%p258) target = $region12
      $region11: #{tpu_custom_call.1} parent=5 // pred_region
        %s262 = ssub.s32 %s23, 1
        // Predicated region
        $region13: #{tpu_custom_call.1} parent=11 // pred_check
          %p263 = pneg %p115
        $region14: #{tpu_custom_call.1} parent=11 // pred_check_branch
          %265 = sbr.rel (%p263) target = $region16
        $region15: #{tpu_custom_call.1} parent=11 // pred_region
          %s266 = smul.u32 2, %s33
          %p267 = scmp.lt.s32.totalorder %s266, 1
          %s268 = scalar_select %p267, %s266, 1
          %s269 = smul.addr %s268, 8
          %s270 = scalar_lea.vmem %s2, %s269
          %s271 = smul.u32 2, %s33
        $region16: #{tpu_custom_call.1} parent=11 // pred_fallthru
          _
        // Predicated region
        $region17: #{tpu_custom_call.1} parent=11 // pred_check
          %p272 = pneg %p136
        $region18: #{tpu_custom_call.1} parent=11 // pred_check_branch
          %274 = sbr.rel (%p272) target = $region20
        $region19: #{tpu_custom_call.1} parent=11 // pred_region
          _
        $region20: #{tpu_custom_call.1} parent=11 // pred_fallthru
          _
        // Predicated region
        $region21: #{tpu_custom_call.1} parent=11 // pred_check
          %p275 = pneg %p157
        $region22: #{tpu_custom_call.1} parent=11 // pred_check_branch
          %277 = sbr.rel (%p275) target = $region24
        $region23: #{tpu_custom_call.1} parent=11 // pred_region
          %s279 = ssub.s32 64, 64
          %280 = vsyncadd [#allocation6], %s279
          %s282 = sshll.u32 %s4, 4
          %s283 = int_to_ptr.vmem [resolvable:$true] %s282
          %285 = dma.vmem_to_smem %s283, 64, [#allocation7], [#allocation6]
        $region24: #{tpu_custom_call.1} parent=11 // pred_fallthru
          _
        // Predicated region
        $region25: #{tpu_custom_call.1} parent=11 // pred_check
          %p286 = pneg %p178
        $region26: #{tpu_custom_call.1} parent=11 // pred_check_branch
          %288 = sbr.rel (%p286) target = $region28
        $region27: #{tpu_custom_call.1} parent=11 // pred_region
          %s290 = ssub.s32 16, 16
          %291 = vsyncadd [#allocation9], %s290
          %s293 = sshll.u32 %s5, 4
          %s294 = int_to_ptr.vmem [resolvable:$true] %s293
          %296 = dma.vmem_to_smem %s294, 16, [#allocation8], [#allocation9]
        $region28: #{tpu_custom_call.1} parent=11 // pred_fallthru
          _
        // Predicated region
        $region29: #{tpu_custom_call.1} parent=11 // pred_check
          %p297 = pneg %p199
        $region30: #{tpu_custom_call.1} parent=11 // pred_check_branch
          %299 = sbr.rel (%p297) target = $region32
        $region31: #{tpu_custom_call.1} parent=11 // pred_region
          %s301 = ssub.s32 16, 16
          %302 = vsyncadd [#allocation9], %s301
          %s304 = sshll.u32 %s6, 4
          %s305 = int_to_ptr.vmem [resolvable:$true] %s304
          %307 = dma.vmem_to_smem %s305, 16, [#allocation10], [#allocation9]
        $region32: #{tpu_custom_call.1} parent=11 // pred_fallthru
          _
        // Predicated region
        $region33: #{tpu_custom_call.1} parent=11 // pred_check
          %p308 = pneg %p220
        $region34: #{tpu_custom_call.1} parent=11 // pred_check_branch
          %310 = sbr.rel (%p308) target = $region36
        $region35: #{tpu_custom_call.1} parent=11 // pred_region
          _
        $region36: #{tpu_custom_call.1} parent=11 // pred_fallthru
          _
      $region12: #{tpu_custom_call.1} parent=5 // pred_fallthru
        _
      %p311 = scmp.lt.s32.totalorder %s23, 2
      // Predicated region
      $region37: #{tpu_custom_call.1} parent=5 // pred_check
        %p312 = pneg %p311
      $region38: #{tpu_custom_call.1} parent=5 // pred_check_branch
        %314 = sbr.rel (%p312) target = $region40
      $region39: #{tpu_custom_call.1} parent=5 // pred_region
        // Predicated region
        $region41: #{tpu_custom_call.1} parent=39 // pred_check
          %p315 = pneg %p57
        $region42: #{tpu_custom_call.1} parent=39 // pred_check_branch
          %317 = sbr.rel (%p315) target = $region44
        $region43: #{tpu_custom_call.1} parent=39 // pred_region
          %s318 = sand.u32 %s47, 1
          %s319 = scalar_lea.sflag [#allocation4], %s318
          %s320 = sand.u32 %s47, 1
          %s321 = smul.addr %s320, 64
          %s322 = scalar_lea.vmem [#allocation3], %s321
          %s323 = smul.u32 2, %s31
          %s325 = ssub.s32 1024, 1024
          %326 = vsyncadd %s319, %s325
          %s327 = smul.addr %s30, 8
          %s328 = sadd.s32 %s323, %s327
          %s329 = smul.addr %s328, 128
          %s330 = scalar_lea.hbm %s0, %s329
          %s331 = sshll.u32 %s322, 4
          %s332 = int_to_ptr.vmem [resolvable:$true] %s331
          %337 = dma.hbm_to_vmem [thread:$0]  %s330, 1024, %s332, %s319, 128, 128, 8
        $region44: #{tpu_custom_call.1} parent=39 // pred_fallthru
          _
        // Predicated region
        $region45: #{tpu_custom_call.1} parent=39 // pred_check
          %p338 = pneg %p83
        $region46: #{tpu_custom_call.1} parent=39 // pred_check_branch
          %340 = sbr.rel (%p338) target = $region48
        $region47: #{tpu_custom_call.1} parent=39 // pred_region
          %p341 = scmp.lt.s32.totalorder %s30, 1
          %s342 = scalar_select %p341, %s30, 1
          %s343 = smul.addr %s342, 4
          %s344 = smul.addr %s343, 8
          %s345 = scalar_lea.vmem %s1, %s344
        $region48: #{tpu_custom_call.1} parent=39 // pred_fallthru
          _
      $region40: #{tpu_custom_call.1} parent=5 // pred_fallthru
        _
      %p346 = scmp.le.s32.totalorder 1, %s23
      %p347 = scmp.lt.s32.totalorder %s23, 3
      %p348 = pnand %p346, %p347
      %p349 = pneg %p348
      // Predicated region
      $region49: #{tpu_custom_call.1} parent=5 // pred_check
        _
      $region50: #{tpu_custom_call.1} parent=5 // pred_check_branch
        %351 = sbr.rel (%p348) target = $region52
      $region51: #{tpu_custom_call.1} parent=5 // pred_region
        %s352 = ssub.s32 %s23, 1
        %s353 = sand.u32 %s50, 1
        %s354 = scalar_lea.sflag [#allocation4], %s353
        %s355 = sand.u32 %s50, 1
        %s356 = smul.addr %s355, 64
        %s357 = scalar_lea.vmem [#allocation3], %s356
        // Predicated region
        $region53: #{tpu_custom_call.1} parent=51 // pred_check
          %p358 = pneg %p63
        $region54: #{tpu_custom_call.1} parent=51 // pred_check_branch
          %360 = sbr.rel (%p358) target = $region56
        $region55: #{tpu_custom_call.1} parent=51 // pred_region
          %361 = dma.done %s354, 1024
        $region56: #{tpu_custom_call.1} parent=51 // pred_fallthru
          _
        // Predicated region
        $region57: #{tpu_custom_call.1} parent=51 // pred_check
          %p362 = pneg %p157
        $region58: #{tpu_custom_call.1} parent=51 // pred_check_branch
          %364 = sbr.rel (%p362) target = $region60
        $region59: #{tpu_custom_call.1} parent=51 // pred_region
          %365 = dma.done [#allocation6], 64
        $region60: #{tpu_custom_call.1} parent=51 // pred_fallthru
          _
        // Predicated region
        $region61: #{tpu_custom_call.1} parent=51 // pred_check
          %p366 = pneg %p178
        $region62: #{tpu_custom_call.1} parent=51 // pred_check_branch
          %368 = sbr.rel (%p366) target = $region64
        $region63: #{tpu_custom_call.1} parent=51 // pred_region
          %369 = dma.done [#allocation9], 16
        $region64: #{tpu_custom_call.1} parent=51 // pred_fallthru
          _
        // Predicated region
        $region65: #{tpu_custom_call.1} parent=51 // pred_check
          %p370 = pneg %p199
        $region66: #{tpu_custom_call.1} parent=51 // pred_check_branch
          %372 = sbr.rel (%p370) target = $region68
        $region67: #{tpu_custom_call.1} parent=51 // pred_region
          %373 = dma.done [#allocation9], 16
        $region68: #{tpu_custom_call.1} parent=51 // pred_fallthru
          _
        %374 = sfence
        %s375 = sand.u32 %s50, 1
        %s376 = scalar_lea.sflag [#allocation4], %s375
        %s377 = sand.u32 %s50, 1
        %s378 = smul.addr %s377, 64
        %s379 = scalar_lea.vmem [#allocation3], %s378
        %p380 = pneg %p63
        %p381 = pneg %p60
        %p382 = scmp.lt.s32.totalorder %s32, 1
        %s383 = scalar_select %p382, %s32, 1
        %s384 = smul.addr %s383, 4
        %s385 = smul.addr %s384, 8
        %s386 = scalar_lea.vmem %s1, %s385
        %p387 = pneg %p89
        %p388 = pneg %p86
        %s389 = smul.u32 2, %s33
        %p390 = scmp.lt.s32.totalorder %s389, 1
        %s391 = scalar_select %p390, %s389, 1
        %s392 = smul.addr %s391, 8
        %s393 = scalar_lea.vmem %s2, %s392
        %p394 = pneg %p115
        %p395 = pneg %p112
        %p396 = pneg %p136
        %p397 = pneg %p133
        %p398 = pneg %p157
        %p399 = pneg %p154
        %p400 = pneg %p178
        %p401 = pneg %p175
        %p402 = pneg %p199
        %p403 = pneg %p196
        %p404 = pneg %p220
        %p405 = pneg %p217
        %p406 = pneg %p248
        %p407 = pneg %p245
        %s408 = sand.u32 %s235, 1
        %s409 = scalar_lea.sflag [#allocation5], %s408
        %s410 = sand.u32 %s235, 1
        %s411 = smul.addr %s410, 64
        %s412 = scalar_lea.vmem [#allocation11], %s411
        %s413 = smul.u32 2, %s33
        %p414 = scmp.lt.s32.totalorder %s32, 1
        %s415 = scalar_select %p414, %s32, 1
        %s416 = smul.addr %s415, 4
        %s417 = smul.addr %s416, 8
        %s418 = scalar_lea.vmem %s1, %s417
        %s419 = smul.u32 2, %s33
        %p420 = scmp.lt.s32.totalorder %s419, 1
        %s421 = scalar_select %p420, %s419, 1
        %s422 = smul.addr %s421, 8
        %s423 = scalar_lea.vmem %s2, %s422
        %s424 = smul.u32 2, %s33
        %s425 = smul.u32 2, %s33
        %v426 = vld [vmem:[%s423] sm:$0xff]
        %v427 = vld [vmem:[%s423 + $0x8] sm:$0xff]
        %v428 = vld [vmem:[%s3] sm:$0xff]
        %v429 = vld [vmem:[%s418] sm:$0xff]
        %v430 = vld [vmem:[%s418 + $0x8] sm:$0xff]
        %v431 = vld [vmem:[%s418 + $0x10] sm:$0xff]
        %v432 = vld [vmem:[%s418 + $0x18] sm:$0xff]
        %vm433 = vcmask 64512
        %v435 = vsel %vm433, %v429, 0
        %v438 = vsel %vm433, %v430, 0
        %v441 = vsel %vm433, %v431, 0
        %v444 = vsel %vm433, %v432, 0
        %446 = vmatprep.subr.mxu0 0.0
        %447 = vmatpush1.msra.mxu0 %v428
        %448 = vmatprep.subr.mxu0 0.0
        %449 = vmatpush1.msra.mxu0 0.0
        %450 = vmatprep.subr.mxu0 0.0
        %451 = vmatpush1.msra.mxu0 0.0
        %452 = vmatprep.subr.mxu0 0.0
        %453 = vmatpush1.msra.mxu0 0.0
        %454 = vmatprep.subr.mxu0 0.0
        %455 = vmatpush1.msra.mxu0 0.0
        %456 = vmatprep.subr.mxu0 0.0
        %457 = vmatpush1.msra.mxu0 0.0
        %458 = vmatprep.subr.mxu0 0.0
        %459 = vmatpush1.msra.mxu0 0.0
        %460 = vmatprep.subr.mxu0 0.0
        %461 = vmatpush1.msra.mxu0 0.0
        %462 = vmatprep.subr.mxu0 0.0
        %463 = vmatpush1.msra.mxu0 0.0
        %464 = vmatprep.subr.mxu0 0.0
        %465 = vmatpush1.msra.mxu0 0.0
        %466 = vmatprep.subr.mxu0 0.0
        %467 = vmatpush1.msra.mxu0 0.0
        %468 = vmatprep.subr.mxu0 0.0
        %469 = vmatpush1.msra.mxu0 0.0
        %470 = vmatprep.subr.mxu0 0.0
        %471 = vmatpush1.msra.mxu0 0.0
        %472 = vmatprep.subr.mxu0 0.0
        %473 = vmatpush1.msra.mxu0 0.0
        %474 = vmatprep.subr.mxu0 0.0
        %475 = vmatpush1.msra.mxu0 0.0
        %476 = vmatprep.subr.mxu0 0.0
        %477 = vmatpush1.msra.mxu0 0.0
        %478 = vmatprep.subr.mxu0 0.0
        %479 = vmatpush1.msra.mxu0 0.0
        %480 = vmatprep.subr.mxu0 0.0
        %481 = vmatpush1.msra.mxu0 0.0
        %482 = vmatprep.subr.mxu0 0.0
        %483 = vmatpush1.msra.mxu0 0.0
        %484 = vmatprep.subr.mxu0 0.0
        %485 = vmatpush1.msra.mxu0 0.0
        %486 = vmatprep.subr.mxu0 0.0
        %487 = vmatpush1.msra.mxu0 0.0
        %488 = vmatprep.subr.mxu0 0.0
        %489 = vmatpush1.msra.mxu0 0.0
        %490 = vmatprep.subr.mxu0 0.0
        %491 = vmatpush1.msra.mxu0 0.0
        %492 = vmatprep.subr.mxu0 0.0
        %493 = vmatpush1.msra.mxu0 0.0
        %494 = vmatprep.subr.mxu0 0.0
        %495 = vmatpush1.msra.mxu0 0.0
        %496 = vmatprep.subr.mxu0 0.0
        %497 = vmatpush1.msra.mxu0 0.0
        %498 = vmatprep.subr.mxu0 0.0
        %499 = vmatpush1.msra.mxu0 0.0
        %500 = vmatprep.subr.mxu0 0.0
        %501 = vmatpush1.msra.mxu0 0.0
        %502 = vmatprep.subr.mxu0 0.0
        %503 = vmatpush1.msra.mxu0 0.0
        %504 = vmatprep.subr.mxu0 0.0
        %505 = vmatpush1.msra.mxu0 0.0
        %506 = vmatprep.subr.mxu0 0.0
        %507 = vmatpush1.msra.mxu0 0.0
        %508 = vmatprep.subr.mxu0 0.0
        %509 = vmatpush1.msra.mxu0 0.0
        %510 = vmatprep.mubr.f32.mxu0 0.0
        %511 = vmatmul.mubr.f32.gmra.mrb[0].mxu0 %v435
        %v512 = vpop.f32.mrb[0].mxu0
        %v513 = vadd.f32 0.0, %v512
        %v514 = vpop.f32.mrb[0].mxu0
        %515 = vmatprep.mubr.f32.mxu0 0.0
        %516 = vmatmul.mubr.f32.gmra.mrb[0].mxu0 %v438
        %v517 = vpop.f32.mrb[0].mxu0
        %v518 = vadd.f32 0.0, %v517
        %v519 = vpop.f32.mrb[0].mxu0
        %520 = vmatprep.mubr.f32.mxu0 0.0
        %521 = vmatmul.mubr.f32.gmra.mrb[0].mxu0 %v441
        %v522 = vpop.f32.mrb[0].mxu0
        %v523 = vadd.f32 0.0, %v522
        %v524 = vpop.f32.mrb[0].mxu0
        %525 = vmatprep.mubr.f32.mxu0 0.0
        %526 = vmatmul.mubr.f32.gmra.mrb[0].mxu0 %v444
        %v527 = vpop.f32.mrb[0].mxu0
        %v528 = vadd.f32 0.0, %v527
        %v529 = vpop.f32.mrb[0].mxu0
        %530 = vdwg.mxu0
        %v532 = vsel %vm433, %v426, 0
        %v535 = vsel %vm433, %v427, 0
        %537 = vmatprep.subr.mxu0 0.0
        %538 = vmatpush1.msra.mxu0 %v513
        %539 = vmatprep.subr.mxu0 0.0
        %540 = vmatpush1.msra.mxu0 0.0
        %541 = vmatprep.subr.mxu0 0.0
        %542 = vmatpush1.msra.mxu0 0.0
        %543 = vmatprep.subr.mxu0 0.0
        %544 = vmatpush1.msra.mxu0 0.0
        %545 = vmatprep.subr.mxu0 0.0
        %546 = vmatpush1.msra.mxu0 0.0
        %547 = vmatprep.subr.mxu0 0.0
        %548 = vmatpush1.msra.mxu0 0.0
        %549 = vmatprep.subr.mxu0 0.0
        %550 = vmatpush1.msra.mxu0 0.0
        %551 = vmatprep.subr.mxu0 0.0
        %552 = vmatpush1.msra.mxu0 0.0
        %553 = vmatprep.subr.mxu0 0.0
        %554 = vmatpush1.msra.mxu0 0.0
        %555 = vmatprep.subr.mxu0 0.0
        %556 = vmatpush1.msra.mxu0 0.0
        %557 = vmatprep.subr.mxu0 0.0
        %558 = vmatpush1.msra.mxu0 0.0
        %559 = vmatprep.subr.mxu0 0.0
        %560 = vmatpush1.msra.mxu0 0.0
        %561 = vmatprep.subr.mxu0 0.0
        %562 = vmatpush1.msra.mxu0 0.0
        %563 = vmatprep.subr.mxu0 0.0
        %564 = vmatpush1.msra.mxu0 0.0
        %565 = vmatprep.subr.mxu0 0.0
        %566 = vmatpush1.msra.mxu0 0.0
        %567 = vmatprep.subr.mxu0 0.0
        %568 = vmatpush1.msra.mxu0 0.0
        %569 = vmatprep.subr.mxu0 0.0
        %570 = vmatpush1.msra.mxu0 0.0
        %571 = vmatprep.subr.mxu0 0.0
        %572 = vmatpush1.msra.mxu0 0.0
        %573 = vmatprep.subr.mxu0 0.0
        %574 = vmatpush1.msra.mxu0 0.0
        %575 = vmatprep.subr.mxu0 0.0
        %576 = vmatpush1.msra.mxu0 0.0
        %577 = vmatprep.subr.mxu0 0.0
        %578 = vmatpush1.msra.mxu0 0.0
        %579 = vmatprep.subr.mxu0 0.0
        %580 = vmatpush1.msra.mxu0 0.0
        %581 = vmatprep.subr.mxu0 0.0
        %582 = vmatpush1.msra.mxu0 0.0
        %583 = vmatprep.subr.mxu0 0.0
        %584 = vmatpush1.msra.mxu0 0.0
        %585 = vmatprep.subr.mxu0 0.0
        %586 = vmatpush1.msra.mxu0 0.0
        %587 = vmatprep.subr.mxu0 0.0
        %588 = vmatpush1.msra.mxu0 0.0
        %589 = vmatprep.subr.mxu0 0.0
        %590 = vmatpush1.msra.mxu0 0.0
        %591 = vmatprep.subr.mxu0 0.0
        %592 = vmatpush1.msra.mxu0 0.0
        %593 = vmatprep.subr.mxu0 0.0
        %594 = vmatpush1.msra.mxu0 0.0
        %595 = vmatprep.subr.mxu0 0.0
        %596 = vmatpush1.msra.mxu0 0.0
        %597 = vmatprep.subr.mxu0 0.0
        %598 = vmatpush1.msra.mxu0 0.0
        %599 = vmatprep.subr.mxu0 0.0
        %600 = vmatpush1.msra.mxu0 0.0
        %601 = vmatprep.mubr.f32.mxu0 0.0
        %602 = vmatmul.mubr.f32.gmra.mrb[0].mxu0 %v532
        %v603 = vpop.f32.mrb[0].mxu0
        %v604 = vadd.f32 0.0, %v603
        %v605 = vpop.f32.mrb[0].mxu0
        %606 = vmatprep.mubr.f32.mxu0 0.0
        %607 = vmatmul.mubr.f32.gmra.mrb[0].mxu0 %v535
        %v608 = vpop.f32.mrb[0].mxu0
        %v609 = vadd.f32 0.0, %v608
        %v610 = vpop.f32.mrb[0].mxu0
        %611 = vdwg.mxu0
        %612 = vst [vmem:[%s412] sm:$0xff] %v604
        %613 = vst [vmem:[%s412 + $0x8] sm:$0xff] %v609
        %614 = vmatprep.subr.mxu0 0.0
        %615 = vmatpush1.msra.mxu0 %v518
        %616 = vmatprep.subr.mxu0 0.0
        %617 = vmatpush1.msra.mxu0 0.0
        %618 = vmatprep.subr.mxu0 0.0
        %619 = vmatpush1.msra.mxu0 0.0
        %620 = vmatprep.subr.mxu0 0.0
        %621 = vmatpush1.msra.mxu0 0.0
        %622 = vmatprep.subr.mxu0 0.0
        %623 = vmatpush1.msra.mxu0 0.0
        %624 = vmatprep.subr.mxu0 0.0
        %625 = vmatpush1.msra.mxu0 0.0
        %626 = vmatprep.subr.mxu0 0.0
        %627 = vmatpush1.msra.mxu0 0.0
        %628 = vmatprep.subr.mxu0 0.0
        %629 = vmatpush1.msra.mxu0 0.0
        %630 = vmatprep.subr.mxu0 0.0
        %631 = vmatpush1.msra.mxu0 0.0
        %632 = vmatprep.subr.mxu0 0.0
        %633 = vmatpush1.msra.mxu0 0.0
        %634 = vmatprep.subr.mxu0 0.0
        %635 = vmatpush1.msra.mxu0 0.0
        %636 = vmatprep.subr.mxu0 0.0
        %637 = vmatpush1.msra.mxu0 0.0
        %638 = vmatprep.subr.mxu0 0.0
        %639 = vmatpush1.msra.mxu0 0.0
        %640 = vmatprep.subr.mxu0 0.0
        %641 = vmatpush1.msra.mxu0 0.0
        %642 = vmatprep.subr.mxu0 0.0
        %643 = vmatpush1.msra.mxu0 0.0
        %644 = vmatprep.subr.mxu0 0.0
        %645 = vmatpush1.msra.mxu0 0.0
        %646 = vmatprep.subr.mxu0 0.0
        %647 = vmatpush1.msra.mxu0 0.0
        %648 = vmatprep.subr.mxu0 0.0
        %649 = vmatpush1.msra.mxu0 0.0
        %650 = vmatprep.subr.mxu0 0.0
        %651 = vmatpush1.msra.mxu0 0.0
        %652 = vmatprep.subr.mxu0 0.0
        %653 = vmatpush1.msra.mxu0 0.0
        %654 = vmatprep.subr.mxu0 0.0
        %655 = vmatpush1.msra.mxu0 0.0
        %656 = vmatprep.subr.mxu0 0.0
        %657 = vmatpush1.msra.mxu0 0.0
        %658 = vmatprep.subr.mxu0 0.0
        %659 = vmatpush1.msra.mxu0 0.0
        %660 = vmatprep.subr.mxu0 0.0
        %661 = vmatpush1.msra.mxu0 0.0
        %662 = vmatprep.subr.mxu0 0.0
        %663 = vmatpush1.msra.mxu0 0.0
        %664 = vmatprep.subr.mxu0 0.0
        %665 = vmatpush1.msra.mxu0 0.0
        %666 = vmatprep.subr.mxu0 0.0
        %667 = vmatpush1.msra.mxu0 0.0
        %668 = vmatprep.subr.mxu0 0.0
        %669 = vmatpush1.msra.mxu0 0.0
        %670 = vmatprep.subr.mxu0 0.0
        %671 = vmatpush1.msra.mxu0 0.0
        %672 = vmatprep.subr.mxu0 0.0
        %673 = vmatpush1.msra.mxu0 0.0
        %674 = vmatprep.subr.mxu0 0.0
        %675 = vmatpush1.msra.mxu0 0.0
        %676 = vmatprep.subr.mxu0 0.0
        %677 = vmatpush1.msra.mxu0 0.0
        %678 = vmatprep.mubr.f32.mxu0 0.0
        %679 = vmatmul.mubr.f32.gmra.mrb[0].mxu0 %v532
        %v680 = vpop.f32.mrb[0].mxu0
        %v681 = vadd.f32 0.0, %v680
        %v682 = vpop.f32.mrb[0].mxu0
        %683 = vmatprep.mubr.f32.mxu0 0.0
        %684 = vmatmul.mubr.f32.gmra.mrb[0].mxu0 %v535
        %v685 = vpop.f32.mrb[0].mxu0
        %v686 = vadd.f32 0.0, %v685
        %v687 = vpop.f32.mrb[0].mxu0
        %688 = vdwg.mxu0
        %s689 = scalar_lea.vmem %s412, 16 [#allocation11]
        %690 = vst [vmem:[%s689] sm:$0xff] %v681
        %691 = vst [vmem:[%s689 + $0x8] sm:$0xff] %v686
        %692 = vmatprep.subr.mxu0 0.0
        %693 = vmatpush1.msra.mxu0 %v523
        %694 = vmatprep.subr.mxu0 0.0
        %695 = vmatpush1.msra.mxu0 0.0
        %696 = vmatprep.subr.mxu0 0.0
        %697 = vmatpush1.msra.mxu0 0.0
        %698 = vmatprep.subr.mxu0 0.0
        %699 = vmatpush1.msra.mxu0 0.0
        %700 = vmatprep.subr.mxu0 0.0
        %701 = vmatpush1.msra.mxu0 0.0
        %702 = vmatprep.subr.mxu0 0.0
        %703 = vmatpush1.msra.mxu0 0.0
        %704 = vmatprep.subr.mxu0 0.0
        %705 = vmatpush1.msra.mxu0 0.0
        %706 = vmatprep.subr.mxu0 0.0
        %707 = vmatpush1.msra.mxu0 0.0
        %708 = vmatprep.subr.mxu0 0.0
        %709 = vmatpush1.msra.mxu0 0.0
        %710 = vmatprep.subr.mxu0 0.0
        %711 = vmatpush1.msra.mxu0 0.0
        %712 = vmatprep.subr.mxu0 0.0
        %713 = vmatpush1.msra.mxu0 0.0
        %714 = vmatprep.subr.mxu0 0.0
        %715 = vmatpush1.msra.mxu0 0.0
        %716 = vmatprep.subr.mxu0 0.0
        %717 = vmatpush1.msra.mxu0 0.0
        %718 = vmatprep.subr.mxu0 0.0
        %719 = vmatpush1.msra.mxu0 0.0
        %720 = vmatprep.subr.mxu0 0.0
        %721 = vmatpush1.msra.mxu0 0.0
        %722 = vmatprep.subr.mxu0 0.0
        %723 = vmatpush1.msra.mxu0 0.0
        %724 = vmatprep.subr.mxu0 0.0
        %725 = vmatpush1.msra.mxu0 0.0
        %726 = vmatprep.subr.mxu0 0.0
        %727 = vmatpush1.msra.mxu0 0.0
        %728 = vmatprep.subr.mxu0 0.0
        %729 = vmatpush1.msra.mxu0 0.0
        %730 = vmatprep.subr.mxu0 0.0
        %731 = vmatpush1.msra.mxu0 0.0
        %732 = vmatprep.subr.mxu0 0.0
        %733 = vmatpush1.msra.mxu0 0.0
        %734 = vmatprep.subr.mxu0 0.0
        %735 = vmatpush1.msra.mxu0 0.0
        %736 = vmatprep.subr.mxu0 0.0
        %737 = vmatpush1.msra.mxu0 0.0
        %738 = vmatprep.subr.mxu0 0.0
        %739 = vmatpush1.msra.mxu0 0.0
        %740 = vmatprep.subr.mxu0 0.0
        %741 = vmatpush1.msra.mxu0 0.0
        %742 = vmatprep.subr.mxu0 0.0
        %743 = vmatpush1.msra.mxu0 0.0
        %744 = vmatprep.subr.mxu0 0.0
        %745 = vmatpush1.msra.mxu0 0.0
        %746 = vmatprep.subr.mxu0 0.0
        %747 = vmatpush1.msra.mxu0 0.0
        %748 = vmatprep.subr.mxu0 0.0
        %749 = vmatpush1.msra.mxu0 0.0
        %750 = vmatprep.subr.mxu0 0.0
        %751 = vmatpush1.msra.mxu0 0.0
        %752 = vmatprep.subr.mxu0 0.0
        %753 = vmatpush1.msra.mxu0 0.0
        %754 = vmatprep.subr.mxu0 0.0
        %755 = vmatpush1.msra.mxu0 0.0
        %756 = vmatprep.mubr.f32.mxu0 0.0
        %757 = vmatmul.mubr.f32.gmra.mrb[0].mxu0 %v532
        %v758 = vpop.f32.mrb[0].mxu0
        %v759 = vadd.f32 0.0, %v758
        %v760 = vpop.f32.mrb[0].mxu0
        %761 = vmatprep.mubr.f32.mxu0 0.0
        %762 = vmatmul.mubr.f32.gmra.mrb[0].mxu0 %v535
        %v763 = vpop.f32.mrb[0].mxu0
        %v764 = vadd.f32 0.0, %v763
        %v765 = vpop.f32.mrb[0].mxu0
        %766 = vdwg.mxu0
        %s767 = scalar_lea.vmem %s412, 32 [#allocation11]
        %768 = vst [vmem:[%s767] sm:$0xff] %v759
        %769 = vst [vmem:[%s767 + $0x8] sm:$0xff] %v764
        %770 = vmatprep.subr.mxu0 0.0
        %771 = vmatpush1.msra.mxu0 %v528
        %772 = vmatprep.subr.mxu0 0.0
        %773 = vmatpush1.msra.mxu0 0.0
        %774 = vmatprep.subr.mxu0 0.0
        %775 = vmatpush1.msra.mxu0 0.0
        %776 = vmatprep.subr.mxu0 0.0
        %777 = vmatpush1.msra.mxu0 0.0
        %778 = vmatprep.subr.mxu0 0.0
        %779 = vmatpush1.msra.mxu0 0.0
        %780 = vmatprep.subr.mxu0 0.0
        %781 = vmatpush1.msra.mxu0 0.0
        %782 = vmatprep.subr.mxu0 0.0
        %783 = vmatpush1.msra.mxu0 0.0
        %784 = vmatprep.subr.mxu0 0.0
        %785 = vmatpush1.msra.mxu0 0.0
        %786 = vmatprep.subr.mxu0 0.0
        %787 = vmatpush1.msra.mxu0 0.0
        %788 = vmatprep.subr.mxu0 0.0
        %789 = vmatpush1.msra.mxu0 0.0
        %790 = vmatprep.subr.mxu0 0.0
        %791 = vmatpush1.msra.mxu0 0.0
        %792 = vmatprep.subr.mxu0 0.0
        %793 = vmatpush1.msra.mxu0 0.0
        %794 = vmatprep.subr.mxu0 0.0
        %795 = vmatpush1.msra.mxu0 0.0
        %796 = vmatprep.subr.mxu0 0.0
        %797 = vmatpush1.msra.mxu0 0.0
        %798 = vmatprep.subr.mxu0 0.0
        %799 = vmatpush1.msra.mxu0 0.0
        %800 = vmatprep.subr.mxu0 0.0
        %801 = vmatpush1.msra.mxu0 0.0
        %802 = vmatprep.subr.mxu0 0.0
        %803 = vmatpush1.msra.mxu0 0.0
        %804 = vmatprep.subr.mxu0 0.0
        %805 = vmatpush1.msra.mxu0 0.0
        %806 = vmatprep.subr.mxu0 0.0
        %807 = vmatpush1.msra.mxu0 0.0
        %808 = vmatprep.subr.mxu0 0.0
        %809 = vmatpush1.msra.mxu0 0.0
        %810 = vmatprep.subr.mxu0 0.0
        %811 = vmatpush1.msra.mxu0 0.0
        %812 = vmatprep.subr.mxu0 0.0
        %813 = vmatpush1.msra.mxu0 0.0
        %814 = vmatprep.subr.mxu0 0.0
        %815 = vmatpush1.msra.mxu0 0.0
        %816 = vmatprep.subr.mxu0 0.0
        %817 = vmatpush1.msra.mxu0 0.0
        %818 = vmatprep.subr.mxu0 0.0
        %819 = vmatpush1.msra.mxu0 0.0
        %820 = vmatprep.subr.mxu0 0.0
        %821 = vmatpush1.msra.mxu0 0.0
        %822 = vmatprep.subr.mxu0 0.0
        %823 = vmatpush1.msra.mxu0 0.0
        %824 = vmatprep.subr.mxu0 0.0
        %825 = vmatpush1.msra.mxu0 0.0
        %826 = vmatprep.subr.mxu0 0.0
        %827 = vmatpush1.msra.mxu0 0.0
        %828 = vmatprep.subr.mxu0 0.0
        %829 = vmatpush1.msra.mxu0 0.0
        %830 = vmatprep.subr.mxu0 0.0
        %831 = vmatpush1.msra.mxu0 0.0
        %832 = vmatprep.subr.mxu0 0.0
        %833 = vmatpush1.msra.mxu0 0.0
        %834 = vmatprep.mubr.f32.mxu0 0.0
        %835 = vmatmul.mubr.f32.gmra.mrb[0].mxu0 %v532
        %v836 = vpop.f32.mrb[0].mxu0
        %v837 = vadd.f32 0.0, %v836
        %v838 = vpop.f32.mrb[0].mxu0
        %839 = vmatprep.mubr.f32.mxu0 0.0
        %840 = vmatmul.mubr.f32.gmra.mrb[0].mxu0 %v535
        %v841 = vpop.f32.mrb[0].mxu0
        %v842 = vadd.f32 0.0, %v841
        %v843 = vpop.f32.mrb[0].mxu0
        %844 = vdwg.mxu0
        %s845 = scalar_lea.vmem %s412, 48 [#allocation11]
        %846 = vst [vmem:[%s845] sm:$0xff] %v837
        %847 = vst [vmem:[%s845 + $0x8] sm:$0xff] %v842
        %s848 = sld [smem:[#allocation2]]
        %s849 = sld [smem:[#allocation10]]
        %v850 = vld [vmem:[%s412] sm:$0xff]
        %v851 = vld [vmem:[%s412 + $0x8] sm:$0xff]
        %v852 = vstv %s849
        %v853 = vmul.f32 %v852, %v850
        %v854 = vmul.f32 %v852, %v851
        %v855 = vstv %s848
        %v856 = vadd.f32 %v855, %v853
        %v857 = vadd.f32 %v855, %v854
        %s858 = sld [smem:[#allocation10 + $0x1]]
        %v859 = vld [vmem:[%s689] sm:$0xff]
        %v860 = vld [vmem:[%s689 + $0x8] sm:$0xff]
        %v861 = vstv %s858
        %v862 = vmul.f32 %v861, %v859
        %v863 = vmul.f32 %v861, %v860
        %v864 = vadd.f32 %v856, %v862
        %v865 = vadd.f32 %v857, %v863
        %s866 = sld [smem:[#allocation10 + $0x2]]
        %v867 = vld [vmem:[%s767] sm:$0xff]
        %v868 = vld [vmem:[%s767 + $0x8] sm:$0xff]
        %v869 = vstv %s866
        %v870 = vmul.f32 %v869, %v867
        %v871 = vmul.f32 %v869, %v868
        %v872 = vadd.f32 %v864, %v870
        %v873 = vadd.f32 %v865, %v871
        %s874 = sld [smem:[#allocation10 + $0x3]]
        %v875 = vld [vmem:[%s845] sm:$0xff]
        %v876 = vld [vmem:[%s845 + $0x8] sm:$0xff]
        %v877 = vstv %s874
        %v878 = vmul.f32 %v877, %v875
        %v879 = vmul.f32 %v877, %v876
        %v880 = vadd.f32 %v872, %v878
        %v881 = vadd.f32 %v873, %v879
        %s882 = sld [smem:[#allocation7]]
        %v883 = vstv %s882
        %v884 = vmul.f32 %v883, %v850
        %v885 = vmul.f32 %v883, %v851
        %s886 = sld [smem:[#allocation7 + $0x1]]
        %v887 = vstv %s886
        %v888 = vmul.f32 %v887, %v859
        %v889 = vmul.f32 %v887, %v860
        %v890 = vadd.f32 %v884, %v888
        %v891 = vadd.f32 %v885, %v889
        %s892 = sld [smem:[#allocation7 + $0x2]]
        %v893 = vstv %s892
        %v894 = vmul.f32 %v893, %v867
        %v895 = vmul.f32 %v893, %v868
        %v896 = vadd.f32 %v890, %v894
        %v897 = vadd.f32 %v891, %v895
        %s898 = sld [smem:[#allocation7 + $0x3]]
        %v899 = vstv %s898
        %v900 = vmul.f32 %v899, %v875
        %v901 = vmul.f32 %v899, %v876
        %v902 = vadd.f32 %v896, %v900
        %v903 = vadd.f32 %v897, %v901
        %v904 = vld [vmem:[%s357] sm:$0xff]
        %v905 = vld [vmem:[%s357 + $0x8] sm:$0xff]
        %s906 = sld [smem:[#allocation8]]
        %v907 = vstv %s906
        %v908 = vadd.f32 %v902, %v907
        %v909 = vadd.f32 %v903, %v907
        %v910 = vmul.f32 %v904, %v908
        %v911 = vmul.f32 %v905, %v909
        %v912 = vadd.f32 %v880, %v910
        %v913 = vadd.f32 %v881, %v911
        %s914 = sld [smem:[#allocation7 + $0x80]]
        %v915 = vstv %s914
        %v916 = vmul.f32 %v915, %v850
        %v917 = vmul.f32 %v915, %v851
        %s918 = sld [smem:[#allocation7 + $0x81]]
        %v919 = vstv %s918
        %v920 = vmul.f32 %v919, %v859
        %v921 = vmul.f32 %v919, %v860
        %v922 = vadd.f32 %v916, %v920
        %v923 = vadd.f32 %v917, %v921
        %s924 = sld [smem:[#allocation7 + $0x82]]
        %v925 = vstv %s924
        %v926 = vmul.f32 %v925, %v867
        %v927 = vmul.f32 %v925, %v868
        %v928 = vadd.f32 %v922, %v926
        %v929 = vadd.f32 %v923, %v927
        %s930 = sld [smem:[#allocation7 + $0x83]]
        %v931 = vstv %s930
        %v932 = vmul.f32 %v931, %v875
        %v933 = vmul.f32 %v931, %v876
        %v934 = vadd.f32 %v928, %v932
        %v935 = vadd.f32 %v929, %v933
        %s936 = scalar_lea.vmem %s357, 16 [#allocation3]
        %v937 = vld [vmem:[%s936] sm:$0xff]
        %v938 = vld [vmem:[%s936 + $0x8] sm:$0xff]
        %s939 = sld [smem:[#allocation8 + $0x1]]
        %v940 = vstv %s939
        %v941 = vadd.f32 %v934, %v940
        %v942 = vadd.f32 %v935, %v940
        %v943 = vmul.f32 %v937, %v941
        %v944 = vmul.f32 %v938, %v942
        %v945 = vadd.f32 %v912, %v943
        %v946 = vadd.f32 %v913, %v944
        %s947 = sld [smem:[#allocation7 + $0x100]]
        %v948 = vstv %s947
        %v949 = vmul.f32 %v948, %v850
        %v950 = vmul.f32 %v948, %v851
        %s951 = sld [smem:[#allocation7 + $0x101]]
        %v952 = vstv %s951
        %v953 = vmul.f32 %v952, %v859
        %v954 = vmul.f32 %v952, %v860
        %v955 = vadd.f32 %v949, %v953
        %v956 = vadd.f32 %v950, %v954
        %s957 = sld [smem:[#allocation7 + $0x102]]
        %v958 = vstv %s957
        %v959 = vmul.f32 %v958, %v867
        %v960 = vmul.f32 %v958, %v868
        %v961 = vadd.f32 %v955, %v959
        %v962 = vadd.f32 %v956, %v960
        %s963 = sld [smem:[#allocation7 + $0x103]]
        %v964 = vstv %s963
        %v965 = vmul.f32 %v964, %v875
        %v966 = vmul.f32 %v964, %v876
        %v967 = vadd.f32 %v961, %v965
        %v968 = vadd.f32 %v962, %v966
        %s969 = scalar_lea.vmem %s357, 32 [#allocation3]
        %v970 = vld [vmem:[%s969] sm:$0xff]
        %v971 = vld [vmem:[%s969 + $0x8] sm:$0xff]
        %s972 = sld [smem:[#allocation8 + $0x2]]
        %v973 = vstv %s972
        %v974 = vadd.f32 %v967, %v973
        %v975 = vadd.f32 %v968, %v973
        %v976 = vmul.f32 %v970, %v974
        %v977 = vmul.f32 %v971, %v975
        %v978 = vadd.f32 %v945, %v976
        %v979 = vadd.f32 %v946, %v977
        %s980 = sld [smem:[#allocation7 + $0x180]]
        %v981 = vstv %s980
        %v982 = vmul.f32 %v981, %v850
        %v983 = vmul.f32 %v981, %v851
        %s984 = sld [smem:[#allocation7 + $0x181]]
        %v985 = vstv %s984
        %v986 = vmul.f32 %v985, %v859
        %v987 = vmul.f32 %v985, %v860
        %v988 = vadd.f32 %v982, %v986
        %v989 = vadd.f32 %v983, %v987
        %s990 = sld [smem:[#allocation7 + $0x182]]
        %v991 = vstv %s990
        %v992 = vmul.f32 %v991, %v867
        %v993 = vmul.f32 %v991, %v868
        %v994 = vadd.f32 %v988, %v992
        %v995 = vadd.f32 %v989, %v993
        %s996 = sld [smem:[#allocation7 + $0x183]]
        %v997 = vstv %s996
        %v998 = vmul.f32 %v997, %v875
        %v999 = vmul.f32 %v997, %v876
        %v1000 = vadd.f32 %v994, %v998
        %v1001 = vadd.f32 %v995, %v999
        %s1002 = scalar_lea.vmem %s357, 48 [#allocation3]
        %v1003 = vld [vmem:[%s1002] sm:$0xff]
        %v1004 = vld [vmem:[%s1002 + $0x8] sm:$0xff]
        %s1005 = sld [smem:[#allocation8 + $0x3]]
        %v1006 = vstv %s1005
        %v1007 = vadd.f32 %v1000, %v1006
        %v1008 = vadd.f32 %v1001, %v1006
        %v1009 = vmul.f32 %v1003, %v1007
        %v1010 = vmul.f32 %v1004, %v1008
        %v1011 = vadd.f32 %v978, %v1009
        %v1012 = vadd.f32 %v979, %v1010
        %v1013 = vxor.u32 %v1011, 2147483648
        %v1014 = vxor.u32 %v1012, 2147483648
        %v1015 = vmul.f32 %v1013, 1.442695
        %v1016 = vpow.pop %v1015
        %v1017 = vmul.f32 %v1014, 1.442695
        %v1018 = vpow.pop %v1017
        %v1019 = vadd.f32 %v1016, 1.0
        %v1020 = vadd.f32 %v1018, 1.0
        %v1021 = vrcp.pop %v1019
        %v1022 = vmul.f32 1.0, %v1021
        %v1023 = vrcp.pop %v1020
        %v1024 = vmul.f32 1.0, %v1023
        %v1025 = vsub.f32 %v850, %v904
        %v1026 = vsub.f32 %v851, %v905
        %v1027 = vmul.f32 %v1022, %v1025
        %v1028 = vmul.f32 %v1024, %v1026
        %v1029 = vadd.f32 %v904, %v1027
        %v1030 = vadd.f32 %v905, %v1028
        %1031 = vst [vmem:[%s412] sm:$0xff] %v1029
        %1032 = vst [vmem:[%s412 + $0x8] sm:$0xff] %v1030
        %v1033 = vld [vmem:[%s936] sm:$0xff]
        %v1034 = vld [vmem:[%s936 + $0x8] sm:$0xff]
        %v1035 = vld [vmem:[%s689] sm:$0xff]
        %v1036 = vld [vmem:[%s689 + $0x8] sm:$0xff]
        %v1037 = vsub.f32 %v1035, %v1033
        %v1038 = vsub.f32 %v1036, %v1034
        %v1039 = vmul.f32 %v1022, %v1037
        %v1040 = vmul.f32 %v1024, %v1038
        %v1041 = vadd.f32 %v1033, %v1039
        %v1042 = vadd.f32 %v1034, %v1040
        %1043 = vst [vmem:[%s689] sm:$0xff] %v1041
        %1044 = vst [vmem:[%s689 + $0x8] sm:$0xff] %v1042
        %v1045 = vld [vmem:[%s969] sm:$0xff]
        %v1046 = vld [vmem:[%s969 + $0x8] sm:$0xff]
        %v1047 = vld [vmem:[%s767] sm:$0xff]
        %v1048 = vld [vmem:[%s767 + $0x8] sm:$0xff]
        %v1049 = vsub.f32 %v1047, %v1045
        %v1050 = vsub.f32 %v1048, %v1046
        %v1051 = vmul.f32 %v1022, %v1049
        %v1052 = vmul.f32 %v1024, %v1050
        %v1053 = vadd.f32 %v1045, %v1051
        %v1054 = vadd.f32 %v1046, %v1052
        %1055 = vst [vmem:[%s767] sm:$0xff] %v1053
        %1056 = vst [vmem:[%s767 + $0x8] sm:$0xff] %v1054
        %v1057 = vld [vmem:[%s1002] sm:$0xff]
        %v1058 = vld [vmem:[%s1002 + $0x8] sm:$0xff]
        %v1059 = vld [vmem:[%s845] sm:$0xff]
        %v1060 = vld [vmem:[%s845 + $0x8] sm:$0xff]
        %v1061 = vsub.f32 %v1059, %v1057
        %v1062 = vsub.f32 %v1060, %v1058
        %v1063 = vmul.f32 %v1022, %v1061
        %v1064 = vmul.f32 %v1024, %v1062
        %v1065 = vadd.f32 %v1057, %v1063
        %v1066 = vadd.f32 %v1058, %v1064
        %1067 = vst [vmem:[%s845] sm:$0xff] %v1065
        %1068 = vst [vmem:[%s845 + $0x8] sm:$0xff] %v1066
        %s1069 = sand.u32 %s235, 1
        %s1070 = scalar_lea.sflag [#allocation5], %s1069
        %s1071 = sand.u32 %s235, 1
        %s1072 = smul.addr %s1071, 64
        %s1073 = scalar_lea.vmem [#allocation11], %s1072
        // Predicated region
        $region69: #{tpu_custom_call.1} parent=51 // pred_check
          %p1074 = pneg %p245
        $region70: #{tpu_custom_call.1} parent=51 // pred_check_branch
          %1076 = sbr.rel (%p1074) target = $region72
        $region71: #{tpu_custom_call.1} parent=51 // pred_region
          %s1077 = smul.u32 2, %s33
          %s1079 = ssub.s32 1024, 1024
          %1080 = vsyncadd %s1070, %s1079
          %s1081 = smul.addr %s32, 8
          %s1082 = sadd.s32 %s1077, %s1081
          %s1083 = smul.addr %s1082, 128
          %s1084 = scalar_lea.hbm %s8, %s1083
          %s1085 = sshll.u32 %s1073, 4
          %s1086 = int_to_ptr.vmem [resolvable:$true] %s1085
          %1091 = dma.vmem_to_hbm [thread:$0]  %s1086, 1024, %s1084, %s1070, 128, 128, 8
        $region72: #{tpu_custom_call.1} parent=51 // pred_fallthru
          _
      $region52: #{tpu_custom_call.1} parent=5 // pred_fallthru
        _
      %p1092 = scmp.le.s32.totalorder 2, %s23
      // Predicated region
      $region73: #{tpu_custom_call.1} parent=5 // pred_check
        %p1093 = pneg %p1092
      $region74: #{tpu_custom_call.1} parent=5 // pred_check_branch
        %1095 = sbr.rel (%p1093) target = $region76
      $region75: #{tpu_custom_call.1} parent=5 // pred_region
        %s1096 = ssub.s32 %s23, 2
        // Predicated region
        $region77: #{tpu_custom_call.1} parent=75 // pred_check
          %p1097 = pneg %p251
        $region78: #{tpu_custom_call.1} parent=75 // pred_check_branch
          %1099 = sbr.rel (%p1097) target = $region80
        $region79: #{tpu_custom_call.1} parent=75 // pred_region
          %s1100 = sand.u32 %s236, 1
          %s1101 = scalar_lea.sflag [#allocation5], %s1100
          %s1102 = sand.u32 %s236, 1
          %s1103 = smul.addr %s1102, 64
          %s1104 = scalar_lea.vmem [#allocation11], %s1103
          %1105 = dma.done %s1101, 1024
        $region80: #{tpu_custom_call.1} parent=75 // pred_fallthru
          _
      $region76: #{tpu_custom_call.1} parent=5 // pred_fallthru
        _
    $region6: #{tpu_custom_call.1} parent=1 // loop_footer
      %s27 = sadd.s32 1, %s23
    $region7: #{tpu_custom_call.1} parent=1 // loop_footer_branch
      %22 = sbr.rel target = $region3
    $region8: #{tpu_custom_call.1} parent=1 // loop_exit
      _
    %1106 = vsyncpa [#allocation4], 1
    %s1107 = scalar_lea.sflag [#allocation4], 1
    %1108 = vsyncpa %s1107, 1
    %1109 = vsyncpa [#allocation5], 1
    %s1110 = scalar_lea.sflag [#allocation5], 1
    %1111 = vsyncpa %s1110, 1
    %1112 = vsyncpa [#allocation6], 1
    %s1113 = scalar_lea.sflag [#allocation6], 1
    %1114 = vsyncpa %s1113, 1
    %1115 = vsyncpa [#allocation9], 1

</llo_original>
